<compile_context>
chip_gen: v6e
topology: v6e:2x2x1
jax: 0.10.0
libtpu: 0.0.40
codegen_flags: <defaults>
</compile_context>

<pallas_src>
import jax
import jax.numpy as jnp
from jax.experimental import pallas as pl
from jax.experimental.pallas import tpu as pltpu


FEAT_DIM = 64
HEAD_HID = 32 + 32 + 16 + 16     # fused head hidden width = 96
HEAD_OUT = 8                     # packed head columns: [vel(2)|mag(2)|pres(1)|dens(1)|pad(2)]
MAX_TILE_B = 2048
MIN_TILE_B = 256


def _pick_tile_b(batch):
    """Largest tile <= 2048 (multiple of 256) that still yields >= 2 grid steps when
    possible, so the 'parallel' axis can shard across v7x's two TensorCores."""
    half = -(-batch // 2)                       # cdiv(batch, 2)
    t = -(-half // MIN_TILE_B) * MIN_TILE_B     # round up to multiple of 256
    return max(MIN_TILE_B, min(MAX_TILE_B, t))


# ----------------------------- Pallas kernel ------------------------------- #

def mhd_pinns_fwd_kernel(
    x_ref,                       # (tile_b, 2) f32 coords tile
    w1, b1,                      # (2,128) f32, (1,128) f32  (layer 1 stays f32 / VPU)
    w2, b2, w3, b3, w4, b4,      # bf16 weights, f32 biases (main_network layers 2-4)
    wh1, bh1,                    # (64,96) bf16, (1,96) f32  fused head layer 1
    wh2, bh2,                    # (96,8)  bf16, (1,8)  f32  block-diag fused head layer 2
    feat_ref,                    # (tile_b, 64) f32 output
    heads_ref,                   # (tile_b, 8)  f32 output
):
    f32 = jnp.float32
    bf16 = jnp.bfloat16

    x = x_ref[...]               # (tile_b, 2)
    w1v = w1[...]                # (2, 128)

    # --- Layer 1 (K=2): two VPU broadcast multiply-adds in f32 ----------------
    h = jnp.tanh(x[:, 0:1] * w1v[0:1, :] + x[:, 1:2] * w1v[1:2, :] + b1[...])

    # --- Layers 2-4: bf16 operands on the MXU, f32 accumulation, f32 tanh -----
    h = jnp.tanh(jnp.dot(h.astype(bf16), w2[...], preferred_element_type=f32) + b2[...])
    h = jnp.tanh(jnp.dot(h.astype(bf16), w3[...], preferred_element_type=f32) + b3[...])
    feats = jnp.tanh(jnp.dot(h.astype(bf16), w4[...], preferred_element_type=f32) + b4[...])

    # --- Fused heads: one (64,96) dot + tanh, one block-diag (96,8) dot -------
    hh = jnp.tanh(jnp.dot(feats.astype(bf16), wh1[...], preferred_element_type=f32) + bh1[...])
    heads = jnp.dot(hh.astype(bf16), wh2[...], preferred_element_type=f32) + bh2[...]

    # --- Direct stores (no concatenate / no wrapper re-slicing of features) ---
    feat_ref[...] = feats
    heads_ref[...] = heads


# ------------------------------ Python wrapper ------------------------------ #

def _pack_head_params(p):
    """Fuse the 4 head layer-1 weights into (64,96) and layer-2 into block-diag (96,8)."""
    wh1 = jnp.concatenate([p["wv1"], p["wm1"], p["wp1"], p["wd1"]], axis=1)   # (64, 96)
    bh1 = jnp.concatenate([p["bv1"], p["bm1"], p["bp1"], p["bd1"]], axis=1)   # (1, 96)

    wh2 = jnp.zeros((HEAD_HID, HEAD_OUT), jnp.float32)
    wh2 = wh2.at[0:32, 0:2].set(p["wv2"])      # velocity
    wh2 = wh2.at[32:64, 2:4].set(p["wm2"])     # magnetic
    wh2 = wh2.at[64:80, 4:5].set(p["wp2"])     # pressure
    wh2 = wh2.at[80:96, 5:6].set(p["wd2"])     # density

    bh2 = jnp.zeros((1, HEAD_OUT), jnp.float32)
    bh2 = bh2.at[:, 0:2].set(p["bv2"])
    bh2 = bh2.at[:, 2:4].set(p["bm2"])
    bh2 = bh2.at[:, 4:5].set(p["bp2"])
    bh2 = bh2.at[:, 5:6].set(p["bd2"])
    return wh1, bh1, wh2, bh2


@jax.jit
def mhd_pinns_forward(coords, params):
    """coords: (B, 2) float32. params: dict with (in,out) weights and (1,out) biases."""
    B = coords.shape[0]
    tile_b = _pick_tile_b(B)
    n_tiles = pl.cdiv(B, tile_b)
    B_pad = n_tiles * tile_b
    if B_pad != B:
        # Padded rows compute tanh(bias) garbage that is sliced off below (benign).
        coords = jnp.pad(coords, ((0, B_pad - B), (0, 0)))

    wh1, bh1, wh2, bh2 = _pack_head_params(params)
    bf16 = jnp.bfloat16

    weight_args = (
        params["w1"], params["b1"],
        params["w2"].astype(bf16), params["b2"],
        params["w3"].astype(bf16), params["b3"],
        params["w4"].astype(bf16), params["b4"],
        wh1.astype(bf16), bh1,
        wh2.astype(bf16), bh2,
    )

    # Batch-tiled coords; weights use constant index_maps so they stay VMEM-resident.
    coords_spec = pl.BlockSpec((tile_b, 2), lambda i: (i, 0))

    def weight_spec(w):
        return pl.BlockSpec(w.shape, lambda i: (0, 0))

    in_specs = [coords_spec] + [weight_spec(w) for w in weight_args]
    out_specs = [
        pl.BlockSpec((tile_b, FEAT_DIM), lambda i: (i, 0)),
        pl.BlockSpec((tile_b, HEAD_OUT), lambda i: (i, 0)),
    ]
    out_shape = (
        jax.ShapeDtypeStruct((B_pad, FEAT_DIM), jnp.float32),
        jax.ShapeDtypeStruct((B_pad, HEAD_OUT), jnp.float32),
    )

    # Advisory cost estimate (flops / tanh count / bytes touched).
    flops_per_row = 2 * (2 * 128 + 128 * 128 + 128 * 128 + 128 * 64
                         + 64 * HEAD_HID + HEAD_HID * HEAD_OUT)
    tanh_per_row = 128 * 3 + 64 + HEAD_HID
    weight_bytes = sum(int(w.size) * w.dtype.itemsize for w in weight_args)
    cost = pl.CostEstimate(
        flops=int(B_pad) * flops_per_row,
        transcendentals=int(B_pad) * tanh_per_row,
        bytes_accessed=int(B_pad) * (2 + FEAT_DIM + HEAD_OUT) * 4 + weight_bytes,
    )

    feats, heads = pl.pallas_call(
        mhd_pinns_fwd_kernel,
        out_shape=out_shape,
        grid=(n_tiles,),
        in_specs=in_specs,
        out_specs=out_specs,
        compiler_params=pltpu.CompilerParams(
            dimension_semantics=("parallel",),
        ),
        cost_estimate=cost,
    )(coords, *weight_args)

    feats = feats[:B]
    heads = heads[:B]
    return {
        "features": feats,
        "velocity": heads[:, 0:2],
        "magnetic": heads[:, 2:4],
        "pressure": heads[:, 4:5],
        "density": heads[:, 5:6],
    }


# --------------------------- deterministic params --------------------------- #

def init_params(key, input_dim=2, hidden_dims=(128, 128, 128, 64)):
    """Deterministic synthetic initialization of all Linear layers ((in,out) layout)."""
    params = {}
    keys = iter(jax.random.split(key, 64))

    def linear(kname_w, kname_b, din, dout):
        kw, kb = next(keys), next(keys)
        scale = 1.0 / jnp.sqrt(jnp.float32(din))
        params[kname_w] = jax.random.uniform(kw, (din, dout), jnp.float32, -1.0, 1.0) * scale
        params[kname_b] = jax.random.uniform(kb, (1, dout), jnp.float32, -1.0, 1.0) * scale

    # main_network: 2 -> 128 -> 128 -> 128 -> 64, Tanh after each
    dims = (input_dim,) + tuple(hidden_dims)
    for i in range(len(hidden_dims)):
        linear(f"w{i+1}", f"b{i+1}", dims[i], dims[i + 1])

    feat = hidden_dims[-1]
    linear("wv1", "bv1", feat, 32)   # velocity head: 64 -> 32 -> 2
    linear("wv2", "bv2", 32, 2)
    linear("wm1", "bm1", feat, 32)   # magnetic head: 64 -> 32 -> 2
    linear("wm2", "bm2", 32, 2)
    linear("wp1", "bp1", feat, 16)   # pressure head: 64 -> 16 -> 1
    linear("wp2", "bp2", 16, 1)
    linear("wd1", "bd1", feat, 16)   # density head: 64 -> 16 -> 1
    linear("wd2", "bd2", 16, 1)
    return params


# ------------------------------ pure-JAX ref -------------------------------- #

def reference_forward(coords, p):
    h = jnp.tanh(coords @ p["w1"] + p["b1"])
    h = jnp.tanh(h @ p["w2"] + p["b2"])
    h = jnp.tanh(h @ p["w3"] + p["b3"])
    feats = jnp.tanh(h @ p["w4"] + p["b4"])
    vel = jnp.tanh(feats @ p["wv1"] + p["bv1"]) @ p["wv2"] + p["bv2"]
    mag = jnp.tanh(feats @ p["wm1"] + p["bm1"]) @ p["wm2"] + p["bm2"]
    pres = jnp.tanh(feats @ p["wp1"] + p["bp1"]) @ p["wp2"] + p["bp2"]
    dens = jnp.tanh(feats @ p["wd1"] + p["bd1"]) @ p["wd2"] + p["bd2"]
    return {"velocity": vel, "magnetic": mag, "pressure": pres,
            "density": dens, "features": feats}


# ---------------------------------- main ------------------------------------ #

if __name__ == "__main__":
    key = jax.random.PRNGKey(0)
    kp, kx = jax.random.split(key)
    params = init_params(kp)

    # bf16 MXU operands (same truncation the TPU applies at DEFAULT precision) bound
    # the deviation from the f32 reference to well below this tolerance.
    TOL = 1e-2

    # Two batch sizes: a small non-multiple-of-256 one (exercises the padding path,
    # tile_b=256) and a larger one (tile_b=2048, >1 grid step per core).
    for B in (300, 5000):
        coords = jax.random.uniform(jax.random.fold_in(kx, B), (B, 2), jnp.float32, -1.0, 1.0)

        out = mhd_pinns_forward(coords, params)
        out = jax.tree_util.tree_map(jax.block_until_ready, out)

        ref = reference_forward(coords, params)
        for name in ("velocity", "magnetic", "pressure", "density", "features"):
            assert out[name].shape == ref[name].shape, (
                f"{name} shape {out[name].shape} vs {ref[name].shape}")
            err = float(jnp.max(jnp.abs(out[name] - ref[name])))
            assert err < TOL, f"B={B} {name} mismatch: {err}"

    print("KERNEL_OK")
</pallas_src>

<mosaic_0001>
module attributes {stable_mosaic.version = 11 : i64} {
  func.func @mhd_pinns_fwd_kernel(%arg0: i32, %arg1: memref<256x2xf32, #tpu.memory_space<vmem>>, %arg2: memref<2x128xf32, #tpu.memory_space<vmem>>, %arg3: memref<1x128xf32, #tpu.memory_space<vmem>>, %arg4: memref<128x128xbf16, #tpu.memory_space<vmem>>, %arg5: memref<1x128xf32, #tpu.memory_space<vmem>>, %arg6: memref<128x128xbf16, #tpu.memory_space<vmem>>, %arg7: memref<1x128xf32, #tpu.memory_space<vmem>>, %arg8: memref<128x64xbf16, #tpu.memory_space<vmem>>, %arg9: memref<1x64xf32, #tpu.memory_space<vmem>>, %arg10: memref<64x96xbf16, #tpu.memory_space<vmem>>, %arg11: memref<1x96xf32, #tpu.memory_space<vmem>>, %arg12: memref<96x8xbf16, #tpu.memory_space<vmem>>, %arg13: memref<1x8xf32, #tpu.memory_space<vmem>>, %arg14: memref<256x64xf32, #tpu.memory_space<vmem>>, %arg15: memref<256x8xf32, #tpu.memory_space<vmem>>) attributes {dimension_semantics = [#tpu.dimension_semantics<parallel>], iteration_bounds = array<i64: 2>, scalar_prefetch = 0 : i64, scratch_operands = 0 : i64, tpu.core_type = #tpu.core_type<tc>, window_params = [{transform_indices = @transform_0, window_bounds = array<i64: 256, 2>}, {pipeline_mode = #tpu.pipeline_mode<synchronous>, transform_indices = @transform_1, window_bounds = array<i64: 2, 128>}, {pipeline_mode = #tpu.pipeline_mode<synchronous>, transform_indices = @transform_2, window_bounds = array<i64: 1, 128>}, {pipeline_mode = #tpu.pipeline_mode<synchronous>, transform_indices = @transform_3, window_bounds = array<i64: 128, 128>}, {pipeline_mode = #tpu.pipeline_mode<synchronous>, transform_indices = @transform_4, window_bounds = array<i64: 1, 128>}, {pipeline_mode = #tpu.pipeline_mode<synchronous>, transform_indices = @transform_5, window_bounds = array<i64: 128, 128>}, {pipeline_mode = #tpu.pipeline_mode<synchronous>, transform_indices = @transform_6, window_bounds = array<i64: 1, 128>}, {pipeline_mode = #tpu.pipeline_mode<synchronous>, transform_indices = @transform_7, window_bounds = array<i64: 128, 64>}, {pipeline_mode = #tpu.pipeline_mode<synchronous>, transform_indices = @transform_8, window_bounds = array<i64: 1, 64>}, {pipeline_mode = #tpu.pipeline_mode<synchronous>, transform_indices = @transform_9, window_bounds = array<i64: 64, 96>}, {pipeline_mode = #tpu.pipeline_mode<synchronous>, transform_indices = @transform_10, window_bounds = array<i64: 1, 96>}, {pipeline_mode = #tpu.pipeline_mode<synchronous>, transform_indices = @transform_11, window_bounds = array<i64: 96, 8>}, {pipeline_mode = #tpu.pipeline_mode<synchronous>, transform_indices = @transform_12, window_bounds = array<i64: 1, 8>}, {transform_indices = @transform_13, window_bounds = array<i64: 256, 64>}, {transform_indices = @transform_14, window_bounds = array<i64: 256, 8>}]} {
    %c0 = arith.constant 0 : index
    %c0_0 = arith.constant 0 : index
    %0 = vector.load %arg1[%c0, %c0_0] : memref<256x2xf32, #tpu.memory_space<vmem>>, vector<256x2xf32>
    %c0_1 = arith.constant 0 : index
    %c0_2 = arith.constant 0 : index
    %1 = vector.load %arg2[%c0_1, %c0_2] : memref<2x128xf32, #tpu.memory_space<vmem>>, vector<2x128xf32>
    %2 = vector.extract_strided_slice %0 {offsets = [0, 0], sizes = [256, 1], strides = [1, 1]} : vector<256x2xf32> to vector<256x1xf32>
    %3 = vector.extract_strided_slice %1 {offsets = [0, 0], sizes = [1, 128], strides = [1, 1]} : vector<2x128xf32> to vector<1x128xf32>
    %4 = vector.broadcast %2 : vector<256x1xf32> to vector<256x128xf32>
    %5 = vector.broadcast %3 : vector<1x128xf32> to vector<256x128xf32>
    %6 = arith.mulf %4, %5 : vector<256x128xf32>
    %7 = vector.extract_strided_slice %0 {offsets = [0, 1], sizes = [256, 1], strides = [1, 1]} : vector<256x2xf32> to vector<256x1xf32>
    %8 = vector.extract_strided_slice %1 {offsets = [1, 0], sizes = [1, 128], strides = [1, 1]} : vector<2x128xf32> to vector<1x128xf32>
    %9 = vector.broadcast %7 : vector<256x1xf32> to vector<256x128xf32>
    %10 = vector.broadcast %8 : vector<1x128xf32> to vector<256x128xf32>
    %11 = arith.mulf %9, %10 : vector<256x128xf32>
    %12 = arith.addf %6, %11 : vector<256x128xf32>
    %c0_3 = arith.constant 0 : index
    %c0_4 = arith.constant 0 : index
    %13 = vector.load %arg3[%c0_3, %c0_4] : memref<1x128xf32, #tpu.memory_space<vmem>>, vector<1x128xf32>
    %14 = vector.broadcast %13 : vector<1x128xf32> to vector<256x128xf32>
    %15 = arith.addf %12, %14 : vector<256x128xf32>
    %16 = math.tanh %15 : vector<256x128xf32>
    %17 = arith.truncf %16 : vector<256x128xf32> to vector<256x128xbf16>
    %c0_5 = arith.constant 0 : index
    %c0_6 = arith.constant 0 : index
    %18 = vector.load %arg4[%c0_5, %c0_6] : memref<128x128xbf16, #tpu.memory_space<vmem>>, vector<128x128xbf16>
    %cst = arith.constant dense<0.000000e+00> : vector<256x128xf32>
    %19 = tpu.matmul %17, %18, %cst {dimension_numbers = #tpu.dot_dimension_numbers<[1], [0], [0], [1], [0, 0, 1, 1], [], []>} : vector<256x128xbf16>, vector<128x128xbf16>, vector<256x128xf32> -> vector<256x128xf32>
    %c0_7 = arith.constant 0 : index
    %c0_8 = arith.constant 0 : index
    %20 = vector.load %arg5[%c0_7, %c0_8] : memref<1x128xf32, #tpu.memory_space<vmem>>, vector<1x128xf32>
    %21 = vector.broadcast %20 : vector<1x128xf32> to vector<256x128xf32>
    %22 = arith.addf %19, %21 : vector<256x128xf32>
    %23 = math.tanh %22 : vector<256x128xf32>
    %24 = arith.truncf %23 : vector<256x128xf32> to vector<256x128xbf16>
    %c0_9 = arith.constant 0 : index
    %c0_10 = arith.constant 0 : index
    %25 = vector.load %arg6[%c0_9, %c0_10] : memref<128x128xbf16, #tpu.memory_space<vmem>>, vector<128x128xbf16>
    %cst_11 = arith.constant dense<0.000000e+00> : vector<256x128xf32>
    %26 = tpu.matmul %24, %25, %cst_11 {dimension_numbers = #tpu.dot_dimension_numbers<[1], [0], [0], [1], [0, 0, 1, 1], [], []>} : vector<256x128xbf16>, vector<128x128xbf16>, vector<256x128xf32> -> vector<256x128xf32>
    %c0_12 = arith.constant 0 : index
    %c0_13 = arith.constant 0 : index
    %27 = vector.load %arg7[%c0_12, %c0_13] : memref<1x128xf32, #tpu.memory_space<vmem>>, vector<1x128xf32>
    %28 = vector.broadcast %27 : vector<1x128xf32> to vector<256x128xf32>
    %29 = arith.addf %26, %28 : vector<256x128xf32>
    %30 = math.tanh %29 : vector<256x128xf32>
    %31 = arith.truncf %30 : vector<256x128xf32> to vector<256x128xbf16>
    %c0_14 = arith.constant 0 : index
    %c0_15 = arith.constant 0 : index
    %32 = vector.load %arg8[%c0_14, %c0_15] : memref<128x64xbf16, #tpu.memory_space<vmem>>, vector<128x64xbf16>
    %cst_16 = arith.constant dense<0.000000e+00> : vector<256x64xf32>
    %33 = tpu.matmul %31, %32, %cst_16 {dimension_numbers = #tpu.dot_dimension_numbers<[1], [0], [0], [1], [0, 0, 1, 1], [], []>} : vector<256x128xbf16>, vector<128x64xbf16>, vector<256x64xf32> -> vector<256x64xf32>
    %c0_17 = arith.constant 0 : index
    %c0_18 = arith.constant 0 : index
    %34 = vector.load %arg9[%c0_17, %c0_18] : memref<1x64xf32, #tpu.memory_space<vmem>>, vector<1x64xf32>
    %35 = vector.broadcast %34 : vector<1x64xf32> to vector<256x64xf32>
    %36 = arith.addf %33, %35 : vector<256x64xf32>
    %37 = math.tanh %36 : vector<256x64xf32>
    %38 = arith.truncf %37 : vector<256x64xf32> to vector<256x64xbf16>
    %c0_19 = arith.constant 0 : index
    %c0_20 = arith.constant 0 : index
    %39 = vector.load %arg10[%c0_19, %c0_20] : memref<64x96xbf16, #tpu.memory_space<vmem>>, vector<64x96xbf16>
    %cst_21 = arith.constant dense<0.000000e+00> : vector<256x96xf32>
    %40 = tpu.matmul %38, %39, %cst_21 {dimension_numbers = #tpu.dot_dimension_numbers<[1], [0], [0], [1], [0, 0, 1, 1], [], []>} : vector<256x64xbf16>, vector<64x96xbf16>, vector<256x96xf32> -> vector<256x96xf32>
    %c0_22 = arith.constant 0 : index
    %c0_23 = arith.constant 0 : index
    %41 = vector.load %arg11[%c0_22, %c0_23] : memref<1x96xf32, #tpu.memory_space<vmem>>, vector<1x96xf32>
    %42 = vector.broadcast %41 : vector<1x96xf32> to vector<256x96xf32>
    %43 = arith.addf %40, %42 : vector<256x96xf32>
    %44 = math.tanh %43 : vector<256x96xf32>
    %45 = arith.truncf %44 : vector<256x96xf32> to vector<256x96xbf16>
    %c0_24 = arith.constant 0 : index
    %c0_25 = arith.constant 0 : index
    %46 = vector.load %arg12[%c0_24, %c0_25] : memref<96x8xbf16, #tpu.memory_space<vmem>>, vector<96x8xbf16>
    %cst_26 = arith.constant dense<0.000000e+00> : vector<256x8xf32>
    %47 = tpu.matmul %45, %46, %cst_26 {dimension_numbers = #tpu.dot_dimension_numbers<[1], [0], [0], [1], [0, 0, 1, 1], [], []>} : vector<256x96xbf16>, vector<96x8xbf16>, vector<256x8xf32> -> vector<256x8xf32>
    %c0_27 = arith.constant 0 : index
    %c0_28 = arith.constant 0 : index
    %48 = vector.load %arg13[%c0_27, %c0_28] : memref<1x8xf32, #tpu.memory_space<vmem>>, vector<1x8xf32>
    %49 = vector.broadcast %48 : vector<1x8xf32> to vector<256x8xf32>
    %50 = arith.addf %47, %49 : vector<256x8xf32>
    %c0_29 = arith.constant 0 : index
    %c0_30 = arith.constant 0 : index
    %51 = vector.load %arg14[%c0_29, %c0_30] : memref<256x64xf32, #tpu.memory_space<vmem>>, vector<256x64xf32>
    tpu.vector_store %arg14[%c0_29, %c0_30], %37 {strides = array<i32>} : memref<256x64xf32, #tpu.memory_space<vmem>>, vector<256x64xf32>,
    %c0_31 = arith.constant 0 : index
    %c0_32 = arith.constant 0 : index
    %52 = vector.load %arg15[%c0_31, %c0_32] : memref<256x8xf32, #tpu.memory_space<vmem>>, vector<256x8xf32>
    tpu.vector_store %arg15[%c0_31, %c0_32], %50 {strides = array<i32>} : memref<256x8xf32, #tpu.memory_space<vmem>>, vector<256x8xf32>,
    return
  }
  func.func @transform_0(%arg0: i32) -> (i32, i32) {
    %c0_i32 = arith.constant 0 : i32
    %c0_i32_0 = arith.constant 0 : i32
    return %arg0, %c0_i32 : i32, i32
  }
  func.func @transform_1(%arg0: i32) -> (i32, i32) {
    %c0_i32 = arith.constant 0 : i32
    %c0_i32_0 = arith.constant 0 : i32
    %c0_i32_1 = arith.constant 0 : i32
    return %c0_i32, %c0_i32_0 : i32, i32
  }
  func.func @transform_2(%arg0: i32) -> (i32, i32) {
    %c0_i32 = arith.constant 0 : i32
    %c0_i32_0 = arith.constant 0 : i32
    %c0_i32_1 = arith.constant 0 : i32
    return %c0_i32, %c0_i32_0 : i32, i32
  }
  func.func @transform_3(%arg0: i32) -> (i32, i32) {
    %c0_i32 = arith.constant 0 : i32
    %c0_i32_0 = arith.constant 0 : i32
    %c0_i32_1 = arith.constant 0 : i32
    return %c0_i32, %c0_i32_0 : i32, i32
  }
  func.func @transform_4(%arg0: i32) -> (i32, i32) {
    %c0_i32 = arith.constant 0 : i32
    %c0_i32_0 = arith.constant 0 : i32
    %c0_i32_1 = arith.constant 0 : i32
    return %c0_i32, %c0_i32_0 : i32, i32
  }
  func.func @transform_5(%arg0: i32) -> (i32, i32) {
    %c0_i32 = arith.constant 0 : i32
    %c0_i32_0 = arith.constant 0 : i32
    %c0_i32_1 = arith.constant 0 : i32
    return %c0_i32, %c0_i32_0 : i32, i32
  }
  func.func @transform_6(%arg0: i32) -> (i32, i32) {
    %c0_i32 = arith.constant 0 : i32
    %c0_i32_0 = arith.constant 0 : i32
    %c0_i32_1 = arith.constant 0 : i32
    return %c0_i32, %c0_i32_0 : i32, i32
  }
  func.func @transform_7(%arg0: i32) -> (i32, i32) {
    %c0_i32 = arith.constant 0 : i32
    %c0_i32_0 = arith.constant 0 : i32
    %c0_i32_1 = arith.constant 0 : i32
    return %c0_i32, %c0_i32_0 : i32, i32
  }
  func.func @transform_8(%arg0: i32) -> (i32, i32) {
    %c0_i32 = arith.constant 0 : i32
    %c0_i32_0 = arith.constant 0 : i32
    %c0_i32_1 = arith.constant 0 : i32
    return %c0_i32, %c0_i32_0 : i32, i32
  }
  func.func @transform_9(%arg0: i32) -> (i32, i32) {
    %c0_i32 = arith.constant 0 : i32
    %c0_i32_0 = arith.constant 0 : i32
    %c0_i32_1 = arith.constant 0 : i32
    return %c0_i32, %c0_i32_0 : i32, i32
  }
  func.func @transform_10(%arg0: i32) -> (i32, i32) {
    %c0_i32 = arith.constant 0 : i32
    %c0_i32_0 = arith.constant 0 : i32
    %c0_i32_1 = arith.constant 0 : i32
    return %c0_i32, %c0_i32_0 : i32, i32
  }
  func.func @transform_11(%arg0: i32) -> (i32, i32) {
    %c0_i32 = arith.constant 0 : i32
    %c0_i32_0 = arith.constant 0 : i32
    %c0_i32_1 = arith.constant 0 : i32
    return %c0_i32, %c0_i32_0 : i32, i32
  }
  func.func @transform_12(%arg0: i32) -> (i32, i32) {
    %c0_i32 = arith.constant 0 : i32
    %c0_i32_0 = arith.constant 0 : i32
    %c0_i32_1 = arith.constant 0 : i32
    return %c0_i32, %c0_i32_0 : i32, i32
  }
  func.func @transform_13(%arg0: i32) -> (i32, i32) {
    %c0_i32 = arith.constant 0 : i32
    %c0_i32_0 = arith.constant 0 : i32
    return %arg0, %c0_i32 : i32, i32
  }
  func.func @transform_14(%arg0: i32) -> (i32, i32) {
    %c0_i32 = arith.constant 0 : i32
    %c0_i32_0 = arith.constant 0 : i32
    return %arg0, %c0_i32 : i32, i32
  }
}

</mosaic_0001>

<llo_original>
// kernel: mhd_pinns_forward.1
$region0: #{mhd_pinns_forward.1}
  #allocation0 [shape = 'u32[]', space=smem, size = 0x4, offset = 0x4, fixed_abs, tag = 'smem constant byte address 0x4 - core index']
  #allocation1 [shape = 'u32[144,128]{1,0:T(1,128)}', space=vmem, size = 0x12000, scoped, tag = 'internal scratch']
  %s0 = inlined_call_operand.vmem [shape: f32[512,2], index: 0, kind: input, shape index: {}]
  %s1 = inlined_call_operand.vmem [shape: f32[2,128], index: 1, kind: input, shape index: {}]
  %s2 = inlined_call_operand.vmem [shape: f32[1,128], index: 2, kind: input, shape index: {}]
  %s3 = inlined_call_operand.vmem [shape: bf16[128,128], index: 3, kind: input, shape index: {}]
  %s4 = inlined_call_operand.vmem [shape: f32[1,128], index: 4, kind: input, shape index: {}]
  %s5 = inlined_call_operand.vmem [shape: bf16[128,128], index: 5, kind: input, shape index: {}]
  %s6 = inlined_call_operand.vmem [shape: f32[1,128], index: 6, kind: input, shape index: {}]
  %s7 = inlined_call_operand.vmem [shape: bf16[128,64], index: 7, kind: input, shape index: {}]
  %s8 = inlined_call_operand.vmem [shape: f32[1,64], index: 8, kind: input, shape index: {}]
  %s9 = inlined_call_operand.vmem [shape: bf16[64,96], index: 9, kind: input, shape index: {}]
  %s10 = inlined_call_operand.vmem [shape: f32[1,96], index: 10, kind: input, shape index: {}]
  %s11 = inlined_call_operand.vmem [shape: bf16[96,8], index: 11, kind: input, shape index: {}]
  %s12 = inlined_call_operand.vmem [shape: f32[1,8], index: 12, kind: input, shape index: {}]
  %s13 = inlined_call_operand.vmem [shape: f32[512,64], index: 13, kind: output, shape index: {0}]
  %s14 = inlined_call_operand.vmem [shape: f32[512,8], index: 14, kind: output, shape index: {1}]
  %15 = xla_tuple %s13, %s14
  %s16 = sld [smem:[#allocation0]]
  $region93: #{mhd_pinns_forward.1} parent=0
    _
  %s18 = ssub.s32 1, %s16
  %s19 = scalar_select 0, %s18, %s16
  loop: start=0, step=1, limit=4
  $region2: #{mhd_pinns_forward.1} parent=0 // loop_pre_header
    _
  $region3: #{mhd_pinns_forward.1} parent=0 // loop_header
    %s21 = sphi 0, %s25
    %p22 = scmp.ge.s32.totalorder %s21, 4
    %s31 = sphi 0, %s33
    %s34 = sphi 0, %s31
    %s35 = sphi 0, %s34
    %s51 = sphi 0, %s35
    %s55 = sphi 0, %s55
    %s57 = sphi 0, %s55
    %s58 = sphi 0, %s57
    %s72 = sphi 0, %s58
    %s76 = sphi 0, %s76
    %s78 = sphi 0, %s76
    %s79 = sphi 0, %s78
    %s93 = sphi 0, %s79
    %s97 = sphi 0, %s97
    %s99 = sphi 0, %s97
    %s100 = sphi 0, %s99
    %s114 = sphi 0, %s100
    %s118 = sphi 0, %s118
    %s120 = sphi 0, %s118
    %s121 = sphi 0, %s120
    %s135 = sphi 0, %s121
    %s139 = sphi 0, %s139
    %s141 = sphi 0, %s139
    %s142 = sphi 0, %s141
    %s156 = sphi 0, %s142
    %s160 = sphi 0, %s160
    %s162 = sphi 0, %s160
    %s163 = sphi 0, %s162
    %s177 = sphi 0, %s163
    %s181 = sphi 0, %s181
    %s183 = sphi 0, %s181
    %s184 = sphi 0, %s183
    %s198 = sphi 0, %s184
    %s202 = sphi 0, %s202
    %s204 = sphi 0, %s202
    %s205 = sphi 0, %s204
    %s219 = sphi 0, %s205
    %s223 = sphi 0, %s223
    %s225 = sphi 0, %s223
    %s226 = sphi 0, %s225
    %s240 = sphi 0, %s226
    %s244 = sphi 0, %s244
    %s246 = sphi 0, %s244
    %s247 = sphi 0, %s246
    %s261 = sphi 0, %s247
    %s265 = sphi 0, %s265
    %s267 = sphi 0, %s265
    %s268 = sphi 0, %s267
    %s282 = sphi 0, %s268
    %s286 = sphi 0, %s286
    %s288 = sphi 0, %s286
    %s289 = sphi 0, %s288
    %s303 = sphi 0, %s289
    %s309 = sphi 0, %s311
    %s312 = sphi 0, %s309
    %s313 = sphi 0, %s312
    %s329 = sphi 0, %s313
    %s335 = sphi 0, %s337
    %s338 = sphi 0, %s335
    %s339 = sphi 0, %s338
    %s355 = sphi 0, %s339
  $region4: #{mhd_pinns_forward.1} parent=0 // loop_header_branch
    %24 = sbr.rel (%p22) target = $region8
  $region5: #{mhd_pinns_forward.1} parent=0 // loop_body
    %s26 = ssub.s32 %s21, 1
    %s27 = ssub.s32 %s21, 2
    %s28 = sadd.s32 %s21, 1
    %s29 = ssub.s32 %s21, %s28
    %p30 = scmp.eq.s32.totalorder %s29, 0
    %s32 = sadd.s32 %s31, 1
    %s33 = scalar_select %p30, %s31, %s32
    %p36 = pneg %p30
    %p37 = scmp.eq.s32.totalorder %s21, 1
    %p38 = por %p36, %p37
    %p39 = scmp.ne.s32.totalorder %s31, %s34
    %p40 = scmp.eq.s32.totalorder %s21, 0
    %p41 = por %p39, %p40
    %p42 = scmp.ne.s32.totalorder %s31, %s34
    %p43 = scmp.eq.s32.totalorder %s26, 1
    %p44 = por %p42, %p43
    %p45 = scmp.ne.s32.totalorder %s34, %s35
    %p46 = scmp.eq.s32.totalorder %s26, 0
    %p47 = por %p45, %p46
    %p48 = scmp.ne.s32.totalorder %s34, %s35
    %p49 = scmp.eq.s32.totalorder %s27, 1
    %p50 = por %p48, %p49
    %p52 = scmp.ne.s32.totalorder %s35, %s51
    %p53 = scmp.eq.s32.totalorder %s27, 0
    %p54 = por %p52, %p53
    %s56 = sadd.s32 %s55, 1
    %p59 = scmp.eq.s32.totalorder %s21, 1
    %p60 = scmp.ne.s32.totalorder %s55, %s57
    %p61 = scmp.eq.s32.totalorder %s21, 0
    %p62 = por %p60, %p61
    %p63 = scmp.ne.s32.totalorder %s55, %s57
    %p64 = scmp.eq.s32.totalorder %s26, 1
    %p65 = por %p63, %p64
    %p66 = scmp.ne.s32.totalorder %s57, %s58
    %p67 = scmp.eq.s32.totalorder %s26, 0
    %p68 = por %p66, %p67
    %p69 = scmp.ne.s32.totalorder %s57, %s58
    %p70 = scmp.eq.s32.totalorder %s27, 1
    %p71 = por %p69, %p70
    %p73 = scmp.ne.s32.totalorder %s58, %s72
    %p74 = scmp.eq.s32.totalorder %s27, 0
    %p75 = por %p73, %p74
    %s77 = sadd.s32 %s76, 1
    %p80 = scmp.eq.s32.totalorder %s21, 1
    %p81 = scmp.ne.s32.totalorder %s76, %s78
    %p82 = scmp.eq.s32.totalorder %s21, 0
    %p83 = por %p81, %p82
    %p84 = scmp.ne.s32.totalorder %s76, %s78
    %p85 = scmp.eq.s32.totalorder %s26, 1
    %p86 = por %p84, %p85
    %p87 = scmp.ne.s32.totalorder %s78, %s79
    %p88 = scmp.eq.s32.totalorder %s26, 0
    %p89 = por %p87, %p88
    %p90 = scmp.ne.s32.totalorder %s78, %s79
    %p91 = scmp.eq.s32.totalorder %s27, 1
    %p92 = por %p90, %p91
    %p94 = scmp.ne.s32.totalorder %s79, %s93
    %p95 = scmp.eq.s32.totalorder %s27, 0
    %p96 = por %p94, %p95
    %s98 = sadd.s32 %s97, 1
    %p101 = scmp.eq.s32.totalorder %s21, 1
    %p102 = scmp.ne.s32.totalorder %s97, %s99
    %p103 = scmp.eq.s32.totalorder %s21, 0
    %p104 = por %p102, %p103
    %p105 = scmp.ne.s32.totalorder %s97, %s99
    %p106 = scmp.eq.s32.totalorder %s26, 1
    %p107 = por %p105, %p106
    %p108 = scmp.ne.s32.totalorder %s99, %s100
    %p109 = scmp.eq.s32.totalorder %s26, 0
    %p110 = por %p108, %p109
    %p111 = scmp.ne.s32.totalorder %s99, %s100
    %p112 = scmp.eq.s32.totalorder %s27, 1
    %p113 = por %p111, %p112
    %p115 = scmp.ne.s32.totalorder %s100, %s114
    %p116 = scmp.eq.s32.totalorder %s27, 0
    %p117 = por %p115, %p116
    %s119 = sadd.s32 %s118, 1
    %p122 = scmp.eq.s32.totalorder %s21, 1
    %p123 = scmp.ne.s32.totalorder %s118, %s120
    %p124 = scmp.eq.s32.totalorder %s21, 0
    %p125 = por %p123, %p124
    %p126 = scmp.ne.s32.totalorder %s118, %s120
    %p127 = scmp.eq.s32.totalorder %s26, 1
    %p128 = por %p126, %p127
    %p129 = scmp.ne.s32.totalorder %s120, %s121
    %p130 = scmp.eq.s32.totalorder %s26, 0
    %p131 = por %p129, %p130
    %p132 = scmp.ne.s32.totalorder %s120, %s121
    %p133 = scmp.eq.s32.totalorder %s27, 1
    %p134 = por %p132, %p133
    %p136 = scmp.ne.s32.totalorder %s121, %s135
    %p137 = scmp.eq.s32.totalorder %s27, 0
    %p138 = por %p136, %p137
    %s140 = sadd.s32 %s139, 1
    %p143 = scmp.eq.s32.totalorder %s21, 1
    %p144 = scmp.ne.s32.totalorder %s139, %s141
    %p145 = scmp.eq.s32.totalorder %s21, 0
    %p146 = por %p144, %p145
    %p147 = scmp.ne.s32.totalorder %s139, %s141
    %p148 = scmp.eq.s32.totalorder %s26, 1
    %p149 = por %p147, %p148
    %p150 = scmp.ne.s32.totalorder %s141, %s142
    %p151 = scmp.eq.s32.totalorder %s26, 0
    %p152 = por %p150, %p151
    %p153 = scmp.ne.s32.totalorder %s141, %s142
    %p154 = scmp.eq.s32.totalorder %s27, 1
    %p155 = por %p153, %p154
    %p157 = scmp.ne.s32.totalorder %s142, %s156
    %p158 = scmp.eq.s32.totalorder %s27, 0
    %p159 = por %p157, %p158
    %s161 = sadd.s32 %s160, 1
    %p164 = scmp.eq.s32.totalorder %s21, 1
    %p165 = scmp.ne.s32.totalorder %s160, %s162
    %p166 = scmp.eq.s32.totalorder %s21, 0
    %p167 = por %p165, %p166
    %p168 = scmp.ne.s32.totalorder %s160, %s162
    %p169 = scmp.eq.s32.totalorder %s26, 1
    %p170 = por %p168, %p169
    %p171 = scmp.ne.s32.totalorder %s162, %s163
    %p172 = scmp.eq.s32.totalorder %s26, 0
    %p173 = por %p171, %p172
    %p174 = scmp.ne.s32.totalorder %s162, %s163
    %p175 = scmp.eq.s32.totalorder %s27, 1
    %p176 = por %p174, %p175
    %p178 = scmp.ne.s32.totalorder %s163, %s177
    %p179 = scmp.eq.s32.totalorder %s27, 0
    %p180 = por %p178, %p179
    %s182 = sadd.s32 %s181, 1
    %p185 = scmp.eq.s32.totalorder %s21, 1
    %p186 = scmp.ne.s32.totalorder %s181, %s183
    %p187 = scmp.eq.s32.totalorder %s21, 0
    %p188 = por %p186, %p187
    %p189 = scmp.ne.s32.totalorder %s181, %s183
    %p190 = scmp.eq.s32.totalorder %s26, 1
    %p191 = por %p189, %p190
    %p192 = scmp.ne.s32.totalorder %s183, %s184
    %p193 = scmp.eq.s32.totalorder %s26, 0
    %p194 = por %p192, %p193
    %p195 = scmp.ne.s32.totalorder %s183, %s184
    %p196 = scmp.eq.s32.totalorder %s27, 1
    %p197 = por %p195, %p196
    %p199 = scmp.ne.s32.totalorder %s184, %s198
    %p200 = scmp.eq.s32.totalorder %s27, 0
    %p201 = por %p199, %p200
    %s203 = sadd.s32 %s202, 1
    %p206 = scmp.eq.s32.totalorder %s21, 1
    %p207 = scmp.ne.s32.totalorder %s202, %s204
    %p208 = scmp.eq.s32.totalorder %s21, 0
    %p209 = por %p207, %p208
    %p210 = scmp.ne.s32.totalorder %s202, %s204
    %p211 = scmp.eq.s32.totalorder %s26, 1
    %p212 = por %p210, %p211
    %p213 = scmp.ne.s32.totalorder %s204, %s205
    %p214 = scmp.eq.s32.totalorder %s26, 0
    %p215 = por %p213, %p214
    %p216 = scmp.ne.s32.totalorder %s204, %s205
    %p217 = scmp.eq.s32.totalorder %s27, 1
    %p218 = por %p216, %p217
    %p220 = scmp.ne.s32.totalorder %s205, %s219
    %p221 = scmp.eq.s32.totalorder %s27, 0
    %p222 = por %p220, %p221
    %s224 = sadd.s32 %s223, 1
    %p227 = scmp.eq.s32.totalorder %s21, 1
    %p228 = scmp.ne.s32.totalorder %s223, %s225
    %p229 = scmp.eq.s32.totalorder %s21, 0
    %p230 = por %p228, %p229
    %p231 = scmp.ne.s32.totalorder %s223, %s225
    %p232 = scmp.eq.s32.totalorder %s26, 1
    %p233 = por %p231, %p232
    %p234 = scmp.ne.s32.totalorder %s225, %s226
    %p235 = scmp.eq.s32.totalorder %s26, 0
    %p236 = por %p234, %p235
    %p237 = scmp.ne.s32.totalorder %s225, %s226
    %p238 = scmp.eq.s32.totalorder %s27, 1
    %p239 = por %p237, %p238
    %p241 = scmp.ne.s32.totalorder %s226, %s240
    %p242 = scmp.eq.s32.totalorder %s27, 0
    %p243 = por %p241, %p242
    %s245 = sadd.s32 %s244, 1
    %p248 = scmp.eq.s32.totalorder %s21, 1
    %p249 = scmp.ne.s32.totalorder %s244, %s246
    %p250 = scmp.eq.s32.totalorder %s21, 0
    %p251 = por %p249, %p250
    %p252 = scmp.ne.s32.totalorder %s244, %s246
    %p253 = scmp.eq.s32.totalorder %s26, 1
    %p254 = por %p252, %p253
    %p255 = scmp.ne.s32.totalorder %s246, %s247
    %p256 = scmp.eq.s32.totalorder %s26, 0
    %p257 = por %p255, %p256
    %p258 = scmp.ne.s32.totalorder %s246, %s247
    %p259 = scmp.eq.s32.totalorder %s27, 1
    %p260 = por %p258, %p259
    %p262 = scmp.ne.s32.totalorder %s247, %s261
    %p263 = scmp.eq.s32.totalorder %s27, 0
    %p264 = por %p262, %p263
    %s266 = sadd.s32 %s265, 1
    %p269 = scmp.eq.s32.totalorder %s21, 1
    %p270 = scmp.ne.s32.totalorder %s265, %s267
    %p271 = scmp.eq.s32.totalorder %s21, 0
    %p272 = por %p270, %p271
    %p273 = scmp.ne.s32.totalorder %s265, %s267
    %p274 = scmp.eq.s32.totalorder %s26, 1
    %p275 = por %p273, %p274
    %p276 = scmp.ne.s32.totalorder %s267, %s268
    %p277 = scmp.eq.s32.totalorder %s26, 0
    %p278 = por %p276, %p277
    %p279 = scmp.ne.s32.totalorder %s267, %s268
    %p280 = scmp.eq.s32.totalorder %s27, 1
    %p281 = por %p279, %p280
    %p283 = scmp.ne.s32.totalorder %s268, %s282
    %p284 = scmp.eq.s32.totalorder %s27, 0
    %p285 = por %p283, %p284
    %s287 = sadd.s32 %s286, 1
    %p290 = scmp.eq.s32.totalorder %s21, 1
    %p291 = scmp.ne.s32.totalorder %s286, %s288
    %p292 = scmp.eq.s32.totalorder %s21, 0
    %p293 = por %p291, %p292
    %p294 = scmp.ne.s32.totalorder %s286, %s288
    %p295 = scmp.eq.s32.totalorder %s26, 1
    %p296 = por %p294, %p295
    %p297 = scmp.ne.s32.totalorder %s288, %s289
    %p298 = scmp.eq.s32.totalorder %s26, 0
    %p299 = por %p297, %p298
    %p300 = scmp.ne.s32.totalorder %s288, %s289
    %p301 = scmp.eq.s32.totalorder %s27, 1
    %p302 = por %p300, %p301
    %p304 = scmp.ne.s32.totalorder %s289, %s303
    %p305 = scmp.eq.s32.totalorder %s27, 0
    %p306 = por %p304, %p305
    %s307 = ssub.s32 %s21, %s28
    %p308 = scmp.eq.s32.totalorder %s307, 0
    %s310 = sadd.s32 %s309, 1
    %s311 = scalar_select %p308, %s309, %s310
    %p314 = pneg %p308
    %p315 = scmp.eq.s32.totalorder %s21, 1
    %p316 = por %p314, %p315
    %p317 = scmp.ne.s32.totalorder %s309, %s312
    %p318 = scmp.eq.s32.totalorder %s21, 0
    %p319 = por %p317, %p318
    %p320 = scmp.ne.s32.totalorder %s309, %s312
    %p321 = scmp.eq.s32.totalorder %s26, 1
    %p322 = por %p320, %p321
    %p323 = scmp.ne.s32.totalorder %s312, %s313
    %p324 = scmp.eq.s32.totalorder %s26, 0
    %p325 = por %p323, %p324
    %p326 = scmp.ne.s32.totalorder %s312, %s313
    %p327 = scmp.eq.s32.totalorder %s27, 1
    %p328 = por %p326, %p327
    %p330 = scmp.ne.s32.totalorder %s313, %s329
    %p331 = scmp.eq.s32.totalorder %s27, 0
    %p332 = por %p330, %p331
    %s333 = ssub.s32 %s21, %s28
    %p334 = scmp.eq.s32.totalorder %s333, 0
    %s336 = sadd.s32 %s335, 1
    %s337 = scalar_select %p334, %s335, %s336
    %p340 = pneg %p334
    %p341 = scmp.eq.s32.totalorder %s21, 1
    %p342 = por %p340, %p341
    %p343 = scmp.ne.s32.totalorder %s335, %s338
    %p344 = scmp.eq.s32.totalorder %s21, 0
    %p345 = por %p343, %p344
    %p346 = scmp.ne.s32.totalorder %s335, %s338
    %p347 = scmp.eq.s32.totalorder %s26, 1
    %p348 = por %p346, %p347
    %p349 = scmp.ne.s32.totalorder %s338, %s339
    %p350 = scmp.eq.s32.totalorder %s26, 0
    %p351 = por %p349, %p350
    %p352 = scmp.ne.s32.totalorder %s338, %s339
    %p353 = scmp.eq.s32.totalorder %s27, 1
    %p354 = por %p352, %p353
    %p356 = scmp.ne.s32.totalorder %s339, %s355
    %p357 = scmp.eq.s32.totalorder %s27, 0
    %p358 = por %p356, %p357
    %p359 = scmp.le.s32.totalorder 1, %s21
    %p360 = scmp.lt.s32.totalorder %s21, 3
    %p361 = pnand %p359, %p360
    %p362 = pneg %p361
    // Predicated region
    $region9: #{mhd_pinns_forward.1} parent=5 // pred_check
      _
    $region10: #{mhd_pinns_forward.1} parent=5 // pred_check_branch
      %364 = sbr.rel (%p361) target = $region12
    $region11: #{mhd_pinns_forward.1} parent=5 // pred_region
      %s365 = ssub.s32 %s21, 1
      // Predicated region
      $region13: #{mhd_pinns_forward.1} parent=11 // pred_check
        %p366 = pneg %p68
      $region14: #{mhd_pinns_forward.1} parent=11 // pred_check_branch
        %368 = sbr.rel (%p366) target = $region16
      $region15: #{mhd_pinns_forward.1} parent=11 // pred_region
        _
      $region16: #{mhd_pinns_forward.1} parent=11 // pred_fallthru
        _
      // Predicated region
      $region17: #{mhd_pinns_forward.1} parent=11 // pred_check
        %p369 = pneg %p89
      $region18: #{mhd_pinns_forward.1} parent=11 // pred_check_branch
        %371 = sbr.rel (%p369) target = $region20
      $region19: #{mhd_pinns_forward.1} parent=11 // pred_region
        _
      $region20: #{mhd_pinns_forward.1} parent=11 // pred_fallthru
        _
      // Predicated region
      $region21: #{mhd_pinns_forward.1} parent=11 // pred_check
        %p372 = pneg %p110
      $region22: #{mhd_pinns_forward.1} parent=11 // pred_check_branch
        %374 = sbr.rel (%p372) target = $region24
      $region23: #{mhd_pinns_forward.1} parent=11 // pred_region
        _
      $region24: #{mhd_pinns_forward.1} parent=11 // pred_fallthru
        _
      // Predicated region
      $region25: #{mhd_pinns_forward.1} parent=11 // pred_check
        %p375 = pneg %p131
      $region26: #{mhd_pinns_forward.1} parent=11 // pred_check_branch
        %377 = sbr.rel (%p375) target = $region28
      $region27: #{mhd_pinns_forward.1} parent=11 // pred_region
        _
      $region28: #{mhd_pinns_forward.1} parent=11 // pred_fallthru
        _
      // Predicated region
      $region29: #{mhd_pinns_forward.1} parent=11 // pred_check
        %p378 = pneg %p152
      $region30: #{mhd_pinns_forward.1} parent=11 // pred_check_branch
        %380 = sbr.rel (%p378) target = $region32
      $region31: #{mhd_pinns_forward.1} parent=11 // pred_region
        _
      $region32: #{mhd_pinns_forward.1} parent=11 // pred_fallthru
        _
      // Predicated region
      $region33: #{mhd_pinns_forward.1} parent=11 // pred_check
        %p381 = pneg %p173
      $region34: #{mhd_pinns_forward.1} parent=11 // pred_check_branch
        %383 = sbr.rel (%p381) target = $region36
      $region35: #{mhd_pinns_forward.1} parent=11 // pred_region
        _
      $region36: #{mhd_pinns_forward.1} parent=11 // pred_fallthru
        _
      // Predicated region
      $region37: #{mhd_pinns_forward.1} parent=11 // pred_check
        %p384 = pneg %p194
      $region38: #{mhd_pinns_forward.1} parent=11 // pred_check_branch
        %386 = sbr.rel (%p384) target = $region40
      $region39: #{mhd_pinns_forward.1} parent=11 // pred_region
        _
      $region40: #{mhd_pinns_forward.1} parent=11 // pred_fallthru
        _
      // Predicated region
      $region41: #{mhd_pinns_forward.1} parent=11 // pred_check
        %p387 = pneg %p215
      $region42: #{mhd_pinns_forward.1} parent=11 // pred_check_branch
        %389 = sbr.rel (%p387) target = $region44
      $region43: #{mhd_pinns_forward.1} parent=11 // pred_region
        _
      $region44: #{mhd_pinns_forward.1} parent=11 // pred_fallthru
        _
      // Predicated region
      $region45: #{mhd_pinns_forward.1} parent=11 // pred_check
        %p390 = pneg %p236
      $region46: #{mhd_pinns_forward.1} parent=11 // pred_check_branch
        %392 = sbr.rel (%p390) target = $region48
      $region47: #{mhd_pinns_forward.1} parent=11 // pred_region
        _
      $region48: #{mhd_pinns_forward.1} parent=11 // pred_fallthru
        _
      // Predicated region
      $region49: #{mhd_pinns_forward.1} parent=11 // pred_check
        %p393 = pneg %p257
      $region50: #{mhd_pinns_forward.1} parent=11 // pred_check_branch
        %395 = sbr.rel (%p393) target = $region52
      $region51: #{mhd_pinns_forward.1} parent=11 // pred_region
        _
      $region52: #{mhd_pinns_forward.1} parent=11 // pred_fallthru
        _
      // Predicated region
      $region53: #{mhd_pinns_forward.1} parent=11 // pred_check
        %p396 = pneg %p278
      $region54: #{mhd_pinns_forward.1} parent=11 // pred_check_branch
        %398 = sbr.rel (%p396) target = $region56
      $region55: #{mhd_pinns_forward.1} parent=11 // pred_region
        _
      $region56: #{mhd_pinns_forward.1} parent=11 // pred_fallthru
        _
      // Predicated region
      $region57: #{mhd_pinns_forward.1} parent=11 // pred_check
        %p399 = pneg %p299
      $region58: #{mhd_pinns_forward.1} parent=11 // pred_check_branch
        %401 = sbr.rel (%p399) target = $region60
      $region59: #{mhd_pinns_forward.1} parent=11 // pred_region
        _
      $region60: #{mhd_pinns_forward.1} parent=11 // pred_fallthru
        _
    $region12: #{mhd_pinns_forward.1} parent=5 // pred_fallthru
      _
    %p402 = scmp.lt.s32.totalorder %s21, 2
    // Predicated region
    $region61: #{mhd_pinns_forward.1} parent=5 // pred_check
      %p403 = pneg %p402
    $region62: #{mhd_pinns_forward.1} parent=5 // pred_check_branch
      %405 = sbr.rel (%p403) target = $region64
    $region63: #{mhd_pinns_forward.1} parent=5 // pred_region
      // Predicated region
      $region65: #{mhd_pinns_forward.1} parent=63 // pred_check
        %p406 = pneg %p41
      $region66: #{mhd_pinns_forward.1} parent=63 // pred_check_branch
        %408 = sbr.rel (%p406) target = $region68
      $region67: #{mhd_pinns_forward.1} parent=63 // pred_region
        %s409 = smul.u32 32, %s21
        %p410 = scmp.lt.s32.totalorder %s409, 63
        %s411 = scalar_select %p410, %s409, 63
        %s412 = smul.addr %s411, 8
        %s413 = scalar_lea.vmem %s0, %s412
        %s414 = smul.u32 32, %s21
      $region68: #{mhd_pinns_forward.1} parent=63 // pred_fallthru
        _
    $region64: #{mhd_pinns_forward.1} parent=5 // pred_fallthru
      _
    %p415 = scmp.le.s32.totalorder 1, %s21
    %p416 = scmp.lt.s32.totalorder %s21, 3
    %p417 = pnand %p415, %p416
    %p418 = pneg %p417
    // Predicated region
    $region69: #{mhd_pinns_forward.1} parent=5 // pred_check
      _
    $region70: #{mhd_pinns_forward.1} parent=5 // pred_check_branch
      %420 = sbr.rel (%p417) target = $region72
    $region71: #{mhd_pinns_forward.1} parent=5 // pred_region
      %s421 = ssub.s32 %s21, 1
      %s422 = smul.u32 32, %s26
      %p423 = scmp.lt.s32.totalorder %s422, 63
      %s424 = scalar_select %p423, %s422, 63
      %s425 = smul.addr %s424, 8
      %s426 = scalar_lea.vmem %s0, %s425
      %p427 = pneg %p47
      %p428 = pneg %p44
      %p429 = pneg %p68
      %p430 = pneg %p65
      %p431 = pneg %p89
      %p432 = pneg %p86
      %p433 = pneg %p110
      %p434 = pneg %p107
      %p435 = pneg %p131
      %p436 = pneg %p128
      %p437 = pneg %p152
      %p438 = pneg %p149
      %p439 = pneg %p173
      %p440 = pneg %p170
      %p441 = pneg %p194
      %p442 = pneg %p191
      %p443 = pneg %p215
      %p444 = pneg %p212
      %p445 = pneg %p236
      %p446 = pneg %p233
      %p447 = pneg %p257
      %p448 = pneg %p254
      %p449 = pneg %p278
      %p450 = pneg %p275
      %p451 = pneg %p299
      %p452 = pneg %p296
      %p453 = pneg %p325
      %p454 = pneg %p322
      %s455 = smul.u32 32, %s26
      %p456 = scmp.lt.s32.totalorder %s455, 63
      %s457 = scalar_select %p456, %s455, 63
      %s458 = smul.addr %s457, 8
      %s459 = scalar_lea.vmem %s13, %s458
      %p460 = pneg %p351
      %p461 = pneg %p348
      %s462 = smul.u32 32, %s26
      %p463 = scmp.lt.s32.totalorder %s462, 63
      %s464 = scalar_select %p463, %s462, 63
      %s465 = smul.addr %s464, 8
      %s466 = scalar_lea.vmem %s14, %s465
      %s467 = smul.u32 32, %s26
      %p468 = scmp.lt.s32.totalorder %s467, 63
      %s469 = scalar_select %p468, %s467, 63
      %s470 = smul.addr %s469, 8
      %s471 = scalar_lea.vmem %s0, %s470
      %s472 = smul.u32 32, %s26
      %s473 = smul.u32 32, %s26
      %p474 = scmp.lt.s32.totalorder %s473, 63
      %s475 = scalar_select %p474, %s473, 63
      %s476 = smul.addr %s475, 8
      %s477 = scalar_lea.vmem %s13, %s476
      %s478 = smul.u32 32, %s26
      %s479 = smul.u32 32, %s26
      %p480 = scmp.lt.s32.totalorder %s479, 63
      %s481 = scalar_select %p480, %s479, 63
      %s482 = smul.addr %s481, 8
      %s483 = scalar_lea.vmem %s14, %s482
      %s484 = smul.u32 32, %s26
      %v486 = vld [vmem:[%s471] sm:$0xff]
      %v487 = vld [vmem:[%s471 + $0x8] sm:$0xff]
      %v488 = vld [vmem:[%s471 + $0x10] sm:$0xff]
      %v489 = vld [vmem:[%s471 + $0x18] sm:$0xff]
      %v490 = vld [vmem:[%s471 + $0x20] sm:$0xff]
      %v491 = vld [vmem:[%s471 + $0x28] sm:$0xff]
      %v492 = vld [vmem:[%s471 + $0x30] sm:$0xff]
      %v493 = vld [vmem:[%s471 + $0x38] sm:$0xff]
      %v494 = vld [vmem:[%s471 + $0x40] sm:$0xff]
      %v495 = vld [vmem:[%s471 + $0x48] sm:$0xff]
      %v496 = vld [vmem:[%s471 + $0x50] sm:$0xff]
      %v497 = vld [vmem:[%s471 + $0x58] sm:$0xff]
      %v498 = vld [vmem:[%s471 + $0x60] sm:$0xff]
      %v499 = vld [vmem:[%s471 + $0x68] sm:$0xff]
      %v500 = vld [vmem:[%s471 + $0x70] sm:$0xff]
      %v501 = vld [vmem:[%s471 + $0x78] sm:$0xff]
      %v502 = vld [vmem:[%s471 + $0x80] sm:$0xff]
      %v503 = vld [vmem:[%s471 + $0x88] sm:$0xff]
      %v504 = vld [vmem:[%s471 + $0x90] sm:$0xff]
      %v505 = vld [vmem:[%s471 + $0x98] sm:$0xff]
      %v506 = vld [vmem:[%s471 + $0xa0] sm:$0xff]
      %v507 = vld [vmem:[%s471 + $0xa8] sm:$0xff]
      %v508 = vld [vmem:[%s471 + $0xb0] sm:$0xff]
      %v509 = vld [vmem:[%s471 + $0xb8] sm:$0xff]
      %v510 = vld [vmem:[%s471 + $0xc0] sm:$0xff]
      %v511 = vld [vmem:[%s471 + $0xc8] sm:$0xff]
      %v512 = vld [vmem:[%s471 + $0xd0] sm:$0xff]
      %v513 = vld [vmem:[%s471 + $0xd8] sm:$0xff]
      %v514 = vld [vmem:[%s471 + $0xe0] sm:$0xff]
      %v515 = vld [vmem:[%s471 + $0xe8] sm:$0xff]
      %v516 = vld [vmem:[%s471 + $0xf0] sm:$0xff]
      %v517 = vld [vmem:[%s471 + $0xf8] sm:$0xff]
      %v518 = vld [vmem:[%s1] sm:$0x3]
      %520 = vset.pattern.permute.xlu0 0
      %521 = vperm.xlu0 %520, %v486
      %v522 = vpop.permute.xlu0 %521
      %525 = vset.pattern.permute.xlu0 0
      %526 = vperm.xlu0 %525, %v487
      %v527 = vpop.permute.xlu0 %526
      %530 = vset.pattern.permute.xlu0 0
      %531 = vperm.xlu0 %530, %v488
      %v532 = vpop.permute.xlu0 %531
      %535 = vset.pattern.permute.xlu0 0
      %536 = vperm.xlu0 %535, %v489
      %v537 = vpop.permute.xlu0 %536
      %540 = vset.pattern.permute.xlu0 0
      %541 = vperm.xlu0 %540, %v490
      %v542 = vpop.permute.xlu0 %541
      %545 = vset.pattern.permute.xlu0 0
      %546 = vperm.xlu0 %545, %v491
      %v547 = vpop.permute.xlu0 %546
      %550 = vset.pattern.permute.xlu0 0
      %551 = vperm.xlu0 %550, %v492
      %v552 = vpop.permute.xlu0 %551
      %555 = vset.pattern.permute.xlu0 0
      %556 = vperm.xlu0 %555, %v493
      %v557 = vpop.permute.xlu0 %556
      %560 = vset.pattern.permute.xlu0 0
      %561 = vperm.xlu0 %560, %v494
      %v562 = vpop.permute.xlu0 %561
      %565 = vset.pattern.permute.xlu0 0
      %566 = vperm.xlu0 %565, %v495
      %v567 = vpop.permute.xlu0 %566
      %570 = vset.pattern.permute.xlu0 0
      %571 = vperm.xlu0 %570, %v496
      %v572 = vpop.permute.xlu0 %571
      %575 = vset.pattern.permute.xlu0 0
      %576 = vperm.xlu0 %575, %v497
      %v577 = vpop.permute.xlu0 %576
      %580 = vset.pattern.permute.xlu0 0
      %581 = vperm.xlu0 %580, %v498
      %v582 = vpop.permute.xlu0 %581
      %585 = vset.pattern.permute.xlu0 0
      %586 = vperm.xlu0 %585, %v499
      %v587 = vpop.permute.xlu0 %586
      %590 = vset.pattern.permute.xlu0 0
      %591 = vperm.xlu0 %590, %v500
      %v592 = vpop.permute.xlu0 %591
      %595 = vset.pattern.permute.xlu0 0
      %596 = vperm.xlu0 %595, %v501
      %v597 = vpop.permute.xlu0 %596
      %600 = vset.pattern.permute.xlu0 0
      %601 = vperm.xlu0 %600, %v502
      %v602 = vpop.permute.xlu0 %601
      %605 = vset.pattern.permute.xlu0 0
      %606 = vperm.xlu0 %605, %v503
      %v607 = vpop.permute.xlu0 %606
      %610 = vset.pattern.permute.xlu0 0
      %611 = vperm.xlu0 %610, %v504
      %v612 = vpop.permute.xlu0 %611
      %615 = vset.pattern.permute.xlu0 0
      %616 = vperm.xlu0 %615, %v505
      %v617 = vpop.permute.xlu0 %616
      %620 = vset.pattern.permute.xlu0 0
      %621 = vperm.xlu0 %620, %v506
      %v622 = vpop.permute.xlu0 %621
      %625 = vset.pattern.permute.xlu0 0
      %626 = vperm.xlu0 %625, %v507
      %v627 = vpop.permute.xlu0 %626
      %630 = vset.pattern.permute.xlu0 0
      %631 = vperm.xlu0 %630, %v508
      %v632 = vpop.permute.xlu0 %631
      %635 = vset.pattern.permute.xlu0 0
      %636 = vperm.xlu0 %635, %v509
      %v637 = vpop.permute.xlu0 %636
      %640 = vset.pattern.permute.xlu0 0
      %641 = vperm.xlu0 %640, %v510
      %v642 = vpop.permute.xlu0 %641
      %645 = vset.pattern.permute.xlu0 0
      %646 = vperm.xlu0 %645, %v511
      %v647 = vpop.permute.xlu0 %646
      %650 = vset.pattern.permute.xlu0 0
      %651 = vperm.xlu0 %650, %v512
      %v652 = vpop.permute.xlu0 %651
      %655 = vset.pattern.permute.xlu0 0
      %656 = vperm.xlu0 %655, %v513
      %v657 = vpop.permute.xlu0 %656
      %660 = vset.pattern.permute.xlu0 0
      %661 = vperm.xlu0 %660, %v514
      %v662 = vpop.permute.xlu0 %661
      %665 = vset.pattern.permute.xlu0 0
      %666 = vperm.xlu0 %665, %v515
      %v667 = vpop.permute.xlu0 %666
      %670 = vset.pattern.permute.xlu0 0
      %671 = vperm.xlu0 %670, %v516
      %v672 = vpop.permute.xlu0 %671
      %675 = vset.pattern.permute.xlu0 0
      %676 = vperm.xlu0 %675, %v517
      %v677 = vpop.permute.xlu0 %676
      %v679 = vlaneseq
      %v680 = vshrl.u32 %v679, 7
      %v681 = vsub.s32 0, %v680
      %v682 = vrot.slane %v518, %v681
      %v683 = vmul.f32 %v522, %v682
      %v684 = vmul.f32 %v527, %v682
      %v685 = vmul.f32 %v532, %v682
      %v686 = vmul.f32 %v537, %v682
      %v687 = vmul.f32 %v542, %v682
      %v688 = vmul.f32 %v547, %v682
      %v689 = vmul.f32 %v552, %v682
      %v690 = vmul.f32 %v557, %v682
      %v691 = vmul.f32 %v562, %v682
      %v692 = vmul.f32 %v567, %v682
      %v693 = vmul.f32 %v572, %v682
      %v694 = vmul.f32 %v577, %v682
      %v695 = vmul.f32 %v582, %v682
      %v696 = vmul.f32 %v587, %v682
      %v697 = vmul.f32 %v592, %v682
      %v698 = vmul.f32 %v597, %v682
      %v699 = vmul.f32 %v602, %v682
      %v700 = vmul.f32 %v607, %v682
      %v701 = vmul.f32 %v612, %v682
      %v702 = vmul.f32 %v617, %v682
      %v703 = vmul.f32 %v622, %v682
      %v704 = vmul.f32 %v627, %v682
      %v705 = vmul.f32 %v632, %v682
      %v706 = vmul.f32 %v637, %v682
      %v707 = vmul.f32 %v642, %v682
      %v708 = vmul.f32 %v647, %v682
      %v709 = vmul.f32 %v652, %v682
      %v710 = vmul.f32 %v657, %v682
      %v711 = vmul.f32 %v662, %v682
      %v712 = vmul.f32 %v667, %v682
      %v713 = vmul.f32 %v672, %v682
      %v714 = vmul.f32 %v677, %v682
      %715 = vset.pattern.permute.xlu0 1
      %716 = vperm.xlu0 %715, %v486
      %v717 = vpop.permute.xlu0 %716
      %719 = vset.pattern.permute.xlu0 1
      %720 = vperm.xlu0 %719, %v487
      %v721 = vpop.permute.xlu0 %720
      %723 = vset.pattern.permute.xlu0 1
      %724 = vperm.xlu0 %723, %v488
      %v725 = vpop.permute.xlu0 %724
      %727 = vset.pattern.permute.xlu0 1
      %728 = vperm.xlu0 %727, %v489
      %v729 = vpop.permute.xlu0 %728
      %731 = vset.pattern.permute.xlu0 1
      %732 = vperm.xlu0 %731, %v490
      %v733 = vpop.permute.xlu0 %732
      %735 = vset.pattern.permute.xlu0 1
      %736 = vperm.xlu0 %735, %v491
      %v737 = vpop.permute.xlu0 %736
      %739 = vset.pattern.permute.xlu0 1
      %740 = vperm.xlu0 %739, %v492
      %v741 = vpop.permute.xlu0 %740
      %743 = vset.pattern.permute.xlu0 1
      %744 = vperm.xlu0 %743, %v493
      %v745 = vpop.permute.xlu0 %744
      %747 = vset.pattern.permute.xlu0 1
      %748 = vperm.xlu0 %747, %v494
      %v749 = vpop.permute.xlu0 %748
      %751 = vset.pattern.permute.xlu0 1
      %752 = vperm.xlu0 %751, %v495
      %v753 = vpop.permute.xlu0 %752
      %755 = vset.pattern.permute.xlu0 1
      %756 = vperm.xlu0 %755, %v496
      %v757 = vpop.permute.xlu0 %756
      %759 = vset.pattern.permute.xlu0 1
      %760 = vperm.xlu0 %759, %v497
      %v761 = vpop.permute.xlu0 %760
      %763 = vset.pattern.permute.xlu0 1
      %764 = vperm.xlu0 %763, %v498
      %v765 = vpop.permute.xlu0 %764
      %767 = vset.pattern.permute.xlu0 1
      %768 = vperm.xlu0 %767, %v499
      %v769 = vpop.permute.xlu0 %768
      %771 = vset.pattern.permute.xlu0 1
      %772 = vperm.xlu0 %771, %v500
      %v773 = vpop.permute.xlu0 %772
      %775 = vset.pattern.permute.xlu0 1
      %776 = vperm.xlu0 %775, %v501
      %v777 = vpop.permute.xlu0 %776
      %779 = vset.pattern.permute.xlu0 1
      %780 = vperm.xlu0 %779, %v502
      %v781 = vpop.permute.xlu0 %780
      %783 = vset.pattern.permute.xlu0 1
      %784 = vperm.xlu0 %783, %v503
      %v785 = vpop.permute.xlu0 %784
      %787 = vset.pattern.permute.xlu0 1
      %788 = vperm.xlu0 %787, %v504
      %v789 = vpop.permute.xlu0 %788
      %791 = vset.pattern.permute.xlu0 1
      %792 = vperm.xlu0 %791, %v505
      %v793 = vpop.permute.xlu0 %792
      %795 = vset.pattern.permute.xlu0 1
      %796 = vperm.xlu0 %795, %v506
      %v797 = vpop.permute.xlu0 %796
      %799 = vset.pattern.permute.xlu0 1
      %800 = vperm.xlu0 %799, %v507
      %v801 = vpop.permute.xlu0 %800
      %803 = vset.pattern.permute.xlu0 1
      %804 = vperm.xlu0 %803, %v508
      %v805 = vpop.permute.xlu0 %804
      %807 = vset.pattern.permute.xlu0 1
      %808 = vperm.xlu0 %807, %v509
      %v809 = vpop.permute.xlu0 %808
      %811 = vset.pattern.permute.xlu0 1
      %812 = vperm.xlu0 %811, %v510
      %v813 = vpop.permute.xlu0 %812
      %815 = vset.pattern.permute.xlu0 1
      %816 = vperm.xlu0 %815, %v511
      %v817 = vpop.permute.xlu0 %816
      %819 = vset.pattern.permute.xlu0 1
      %820 = vperm.xlu0 %819, %v512
      %v821 = vpop.permute.xlu0 %820
      %823 = vset.pattern.permute.xlu0 1
      %824 = vperm.xlu0 %823, %v513
      %v825 = vpop.permute.xlu0 %824
      %827 = vset.pattern.permute.xlu0 1
      %828 = vperm.xlu0 %827, %v514
      %v829 = vpop.permute.xlu0 %828
      %831 = vset.pattern.permute.xlu0 1
      %832 = vperm.xlu0 %831, %v515
      %v833 = vpop.permute.xlu0 %832
      %835 = vset.pattern.permute.xlu0 1
      %836 = vperm.xlu0 %835, %v516
      %v837 = vpop.permute.xlu0 %836
      %839 = vset.pattern.permute.xlu0 1
      %840 = vperm.xlu0 %839, %v517
      %v841 = vpop.permute.xlu0 %840
      %v843 = vlaneseq
      %v844 = vshrl.u32 %v843, 7
      %v845 = vsub.s32 1, %v844
      %v846 = vrot.slane %v518, %v845
      %v847 = vmul.f32 %v717, %v846
      %v848 = vmul.f32 %v721, %v846
      %v849 = vmul.f32 %v725, %v846
      %v850 = vmul.f32 %v729, %v846
      %v851 = vmul.f32 %v733, %v846
      %v852 = vmul.f32 %v737, %v846
      %v853 = vmul.f32 %v741, %v846
      %v854 = vmul.f32 %v745, %v846
      %v855 = vmul.f32 %v749, %v846
      %v856 = vmul.f32 %v753, %v846
      %v857 = vmul.f32 %v757, %v846
      %v858 = vmul.f32 %v761, %v846
      %v859 = vmul.f32 %v765, %v846
      %v860 = vmul.f32 %v769, %v846
      %v861 = vmul.f32 %v773, %v846
      %v862 = vmul.f32 %v777, %v846
      %v863 = vmul.f32 %v781, %v846
      %v864 = vmul.f32 %v785, %v846
      %v865 = vmul.f32 %v789, %v846
      %v866 = vmul.f32 %v793, %v846
      %v867 = vmul.f32 %v797, %v846
      %v868 = vmul.f32 %v801, %v846
      %v869 = vmul.f32 %v805, %v846
      %v870 = vmul.f32 %v809, %v846
      %v871 = vmul.f32 %v813, %v846
      %v872 = vmul.f32 %v817, %v846
      %v873 = vmul.f32 %v821, %v846
      %v874 = vmul.f32 %v825, %v846
      %v875 = vmul.f32 %v829, %v846
      %v876 = vmul.f32 %v833, %v846
      %v877 = vmul.f32 %v837, %v846
      %v878 = vmul.f32 %v841, %v846
      %v879 = vadd.f32 %v683, %v847
      %v880 = vadd.f32 %v684, %v848
      %v881 = vadd.f32 %v685, %v849
      %v882 = vadd.f32 %v686, %v850
      %v883 = vadd.f32 %v687, %v851
      %v884 = vadd.f32 %v688, %v852
      %v885 = vadd.f32 %v689, %v853
      %v886 = vadd.f32 %v690, %v854
      %v887 = vadd.f32 %v691, %v855
      %v888 = vadd.f32 %v692, %v856
      %v889 = vadd.f32 %v693, %v857
      %v890 = vadd.f32 %v694, %v858
      %v891 = vadd.f32 %v695, %v859
      %v892 = vadd.f32 %v696, %v860
      %v893 = vadd.f32 %v697, %v861
      %v894 = vadd.f32 %v698, %v862
      %v895 = vadd.f32 %v699, %v863
      %v896 = vadd.f32 %v700, %v864
      %v897 = vadd.f32 %v701, %v865
      %v898 = vadd.f32 %v702, %v866
      %v899 = vadd.f32 %v703, %v867
      %v900 = vadd.f32 %v704, %v868
      %v901 = vadd.f32 %v705, %v869
      %v902 = vadd.f32 %v706, %v870
      %v903 = vadd.f32 %v707, %v871
      %v904 = vadd.f32 %v708, %v872
      %v905 = vadd.f32 %v709, %v873
      %v906 = vadd.f32 %v710, %v874
      %v907 = vadd.f32 %v711, %v875
      %v908 = vadd.f32 %v712, %v876
      %v909 = vadd.f32 %v713, %v877
      %v910 = vadd.f32 %v714, %v878
      %v911 = vld [vmem:[%s2] sm:$0x1]
      %v913 = vlaneseq
      %v914 = vshrl.u32 %v913, 7
      %v915 = vsub.s32 0, %v914
      %v916 = vrot.slane %v911, %v915
      %v918 = vadd.f32 %v879, %v916
      %v919 = vadd.f32 %v880, %v916
      %v920 = vadd.f32 %v881, %v916
      %v921 = vadd.f32 %v882, %v916
      %v922 = vadd.f32 %v883, %v916
      %v923 = vadd.f32 %v884, %v916
      %v924 = vadd.f32 %v885, %v916
      %v925 = vadd.f32 %v886, %v916
      %v926 = vadd.f32 %v887, %v916
      %v927 = vadd.f32 %v888, %v916
      %v928 = vadd.f32 %v889, %v916
      %v929 = vadd.f32 %v890, %v916
      %v930 = vadd.f32 %v891, %v916
      %v931 = vadd.f32 %v892, %v916
      %v932 = vadd.f32 %v893, %v916
      %v933 = vadd.f32 %v894, %v916
      %v934 = vadd.f32 %v895, %v916
      %v935 = vadd.f32 %v896, %v916
      %v936 = vadd.f32 %v897, %v916
      %v937 = vadd.f32 %v898, %v916
      %v938 = vadd.f32 %v899, %v916
      %v939 = vadd.f32 %v900, %v916
      %v940 = vadd.f32 %v901, %v916
      %v941 = vadd.f32 %v902, %v916
      %v942 = vadd.f32 %v903, %v916
      %v943 = vadd.f32 %v904, %v916
      %v944 = vadd.f32 %v905, %v916
      %v945 = vadd.f32 %v906, %v916
      %v946 = vadd.f32 %v907, %v916
      %v947 = vadd.f32 %v908, %v916
      %v948 = vadd.f32 %v909, %v916
      %v949 = vadd.f32 %v910, %v916
      %v950 = vtanh.pop %v918
      %v951 = vtanh.pop %v919
      %v952 = vtanh.pop %v920
      %v953 = vtanh.pop %v921
      %v954 = vtanh.pop %v922
      %v955 = vtanh.pop %v923
      %v956 = vtanh.pop %v924
      %v957 = vtanh.pop %v925
      %v958 = vtanh.pop %v926
      %v959 = vtanh.pop %v927
      %v960 = vtanh.pop %v928
      %v961 = vtanh.pop %v929
      %v962 = vtanh.pop %v930
      %v963 = vtanh.pop %v931
      %v964 = vtanh.pop %v932
      %v965 = vtanh.pop %v933
      %v966 = vtanh.pop %v934
      %v967 = vtanh.pop %v935
      %v968 = vtanh.pop %v936
      %v969 = vtanh.pop %v937
      %v970 = vtanh.pop %v938
      %v971 = vtanh.pop %v939
      %v972 = vtanh.pop %v940
      %v973 = vtanh.pop %v941
      %v974 = vtanh.pop %v942
      %v975 = vtanh.pop %v943
      %v976 = vtanh.pop %v944
      %v977 = vtanh.pop %v945
      %v978 = vtanh.pop %v946
      %v979 = vtanh.pop %v947
      %v980 = vtanh.pop %v948
      %v981 = vtanh.pop %v949
      %v982 = vpack.c.bf16 %v951, %v950
      %v983 = vpack.c.bf16 %v953, %v952
      %v984 = vpack.c.bf16 %v955, %v954
      %v985 = vpack.c.bf16 %v957, %v956
      %v986 = vpack.c.bf16 %v959, %v958
      %v987 = vpack.c.bf16 %v961, %v960
      %v988 = vpack.c.bf16 %v963, %v962
      %v989 = vpack.c.bf16 %v965, %v964
      %v990 = vpack.c.bf16 %v967, %v966
      %v991 = vpack.c.bf16 %v969, %v968
      %v992 = vpack.c.bf16 %v971, %v970
      %v993 = vpack.c.bf16 %v973, %v972
      %v994 = vpack.c.bf16 %v975, %v974
      %v995 = vpack.c.bf16 %v977, %v976
      %v996 = vpack.c.bf16 %v979, %v978
      %v997 = vpack.c.bf16 %v981, %v980
      %v998 = vld [vmem:[%s3] sm:$0xf]
      %v999 = vld [vmem:[%s3 + $0x4] sm:$0xf]
      %v1000 = vld [vmem:[%s3 + $0x8] sm:$0xf]
      %v1001 = vld [vmem:[%s3 + $0xc] sm:$0xf]
      %v1002 = vld [vmem:[%s3 + $0x10] sm:$0xf]
      %v1003 = vld [vmem:[%s3 + $0x14] sm:$0xf]
      %v1004 = vld [vmem:[%s3 + $0x18] sm:$0xf]
      %v1005 = vld [vmem:[%s3 + $0x1c] sm:$0xf]
      %v1006 = vld [vmem:[%s3 + $0x20] sm:$0xf]
      %v1007 = vld [vmem:[%s3 + $0x24] sm:$0xf]
      %v1008 = vld [vmem:[%s3 + $0x28] sm:$0xf]
      %v1009 = vld [vmem:[%s3 + $0x2c] sm:$0xf]
      %v1010 = vld [vmem:[%s3 + $0x30] sm:$0xf]
      %v1011 = vld [vmem:[%s3 + $0x34] sm:$0xf]
      %v1012 = vld [vmem:[%s3 + $0x38] sm:$0xf]
      %v1013 = vld [vmem:[%s3 + $0x3c] sm:$0xf]
      %v1014 = vld [vmem:[%s4] sm:$0x1]
      %v1016 = vlaneseq
      %v1017 = vshrl.u32 %v1016, 7
      %v1018 = vsub.s32 0, %v1017
      %v1019 = vrot.slane %v1014, %v1018
      %v1037 = vunpack.c.l.b16 %v998
      %v1038 = vunpack.c.l.b16 %v999
      %v1039 = vunpack.c.l.b16 %v1000
      %v1040 = vunpack.c.l.b16 %v1001
      %v1041 = vunpack.c.l.b16 %v1002
      %v1042 = vunpack.c.l.b16 %v1003
      %v1043 = vunpack.c.l.b16 %v1004
      %v1044 = vunpack.c.l.b16 %v1005
      %v1045 = vunpack.c.l.b16 %v1006
      %v1046 = vunpack.c.l.b16 %v1007
      %v1047 = vunpack.c.l.b16 %v1008
      %v1048 = vunpack.c.l.b16 %v1009
      %v1049 = vunpack.c.l.b16 %v1010
      %v1050 = vunpack.c.l.b16 %v1011
      %v1051 = vunpack.c.l.b16 %v1012
      %v1052 = vunpack.c.l.b16 %v1013
      %v1053 = vpack.c.b16 %v1038, %v1037
      %v1054 = vpack.c.b16 %v1040, %v1039
      %v1055 = vpack.c.b16 %v1042, %v1041
      %v1056 = vpack.c.b16 %v1044, %v1043
      %v1057 = vpack.c.b16 %v1046, %v1045
      %v1058 = vpack.c.b16 %v1048, %v1047
      %v1059 = vpack.c.b16 %v1050, %v1049
      %v1060 = vpack.c.b16 %v1052, %v1051
      %1069 = vmatprep.subr.bf16.mxu0 0
      %1070 = vmatpush1.bf16.msra.mxu0 %v1060
      %1071 = vmatprep.subr.bf16.mxu0 0
      %1072 = vmatpush1.bf16.msra.mxu0 %v1059
      %1073 = vmatprep.subr.bf16.mxu0 0
      %1074 = vmatpush1.bf16.msra.mxu0 %v1058
      %1075 = vmatprep.subr.bf16.mxu0 0
      %1076 = vmatpush1.bf16.msra.mxu0 %v1057
      %1077 = vmatprep.subr.bf16.mxu0 0
      %1078 = vmatpush1.bf16.msra.mxu0 %v1056
      %1079 = vmatprep.subr.bf16.mxu0 0
      %1080 = vmatpush1.bf16.msra.mxu0 %v1055
      %1081 = vmatprep.subr.bf16.mxu0 0
      %1082 = vmatpush1.bf16.msra.mxu0 %v1054
      %1083 = vmatprep.subr.bf16.mxu0 0
      %1084 = vmatpush1.bf16.msra.mxu0 %v1053
      %1085 = vmatprep.subr.bf16.mxu0 0
      %1086 = vmatpush2.bf16.msra.mxu0 0
      %1087 = vmatprep.subr.bf16.mxu0 0
      %1088 = vmatpush2.bf16.msra.mxu0 0
      %1089 = vmatprep.subr.bf16.mxu0 0
      %1090 = vmatpush2.bf16.msra.mxu0 0
      %1091 = vmatprep.subr.bf16.mxu0 0
      %1092 = vmatpush2.bf16.msra.mxu0 0
      %1093 = vmatprep.subr.bf16.mxu0 0
      %1094 = vmatpush2.bf16.msra.mxu0 0
      %1095 = vmatprep.subr.bf16.mxu0 0
      %1096 = vmatpush2.bf16.msra.mxu0 0
      %1097 = vmatprep.subr.bf16.mxu0 0
      %1098 = vmatpush2.bf16.msra.mxu0 0
      %1099 = vmatprep.subr.bf16.mxu0 0
      %1100 = vmatpush2.bf16.msra.mxu0 0
      %1101 = vmatprep.mubr.bf16.mxu0 0
      %1102 = vmatmul.mubr.bf16.gmra.mxu0 %v982
      %v1103 = vpop.f32.mrf.mxu0
      %v1104 = vadd.f32 %v1019, %v1103
      %v1105 = vpop.f32.mrf.mxu0
      %v1106 = vpop.f32.mrf.mxu0
      %v1107 = vadd.f32 %v1019, %v1106
      %v1108 = vpop.f32.mrf.mxu0
      %1109 = vmatprep.mubr.bf16.mxu0 0
      %1110 = vmatmul.mubr.bf16.gmra.mxu0 %v983
      %v1111 = vpop.f32.mrf.mxu0
      %v1112 = vadd.f32 %v1019, %v1111
      %v1113 = vpop.f32.mrf.mxu0
      %v1114 = vpop.f32.mrf.mxu0
      %v1115 = vadd.f32 %v1019, %v1114
      %v1116 = vpop.f32.mrf.mxu0
      %1117 = vmatprep.mubr.bf16.mxu0 0
      %1118 = vmatmul.mubr.bf16.gmra.mxu0 %v984
      %v1119 = vpop.f32.mrf.mxu0
      %v1120 = vadd.f32 %v1019, %v1119
      %v1121 = vpop.f32.mrf.mxu0
      %v1122 = vpop.f32.mrf.mxu0
      %v1123 = vadd.f32 %v1019, %v1122
      %v1124 = vpop.f32.mrf.mxu0
      %1125 = vmatprep.mubr.bf16.mxu0 0
      %1126 = vmatmul.mubr.bf16.gmra.mxu0 %v985
      %v1127 = vpop.f32.mrf.mxu0
      %v1128 = vadd.f32 %v1019, %v1127
      %v1129 = vpop.f32.mrf.mxu0
      %v1130 = vpop.f32.mrf.mxu0
      %v1131 = vadd.f32 %v1019, %v1130
      %v1132 = vpop.f32.mrf.mxu0
      %1133 = vmatprep.mubr.bf16.mxu0 0
      %1134 = vmatmul.mubr.bf16.gmra.mxu0 %v986
      %v1135 = vpop.f32.mrf.mxu0
      %v1136 = vadd.f32 %v1019, %v1135
      %v1137 = vpop.f32.mrf.mxu0
      %v1138 = vpop.f32.mrf.mxu0
      %v1139 = vadd.f32 %v1019, %v1138
      %v1140 = vpop.f32.mrf.mxu0
      %1141 = vmatprep.mubr.bf16.mxu0 0
      %1142 = vmatmul.mubr.bf16.gmra.mxu0 %v987
      %v1143 = vpop.f32.mrf.mxu0
      %v1144 = vadd.f32 %v1019, %v1143
      %v1145 = vpop.f32.mrf.mxu0
      %v1146 = vpop.f32.mrf.mxu0
      %v1147 = vadd.f32 %v1019, %v1146
      %v1148 = vpop.f32.mrf.mxu0
      %1149 = vmatprep.mubr.bf16.mxu0 0
      %1150 = vmatmul.mubr.bf16.gmra.mxu0 %v988
      %v1151 = vpop.f32.mrf.mxu0
      %v1152 = vadd.f32 %v1019, %v1151
      %v1153 = vpop.f32.mrf.mxu0
      %v1154 = vpop.f32.mrf.mxu0
      %v1155 = vadd.f32 %v1019, %v1154
      %v1156 = vpop.f32.mrf.mxu0
      %1157 = vmatprep.mubr.bf16.mxu0 0
      %1158 = vmatmul.mubr.bf16.gmra.mxu0 %v989
      %v1159 = vpop.f32.mrf.mxu0
      %v1160 = vadd.f32 %v1019, %v1159
      %v1161 = vpop.f32.mrf.mxu0
      %v1162 = vpop.f32.mrf.mxu0
      %v1163 = vadd.f32 %v1019, %v1162
      %v1164 = vpop.f32.mrf.mxu0
      %1165 = vmatprep.mubr.bf16.mxu0 0
      %1166 = vmatmul.mubr.bf16.gmra.mxu0 %v990
      %v1167 = vpop.f32.mrf.mxu0
      %v1168 = vadd.f32 %v1019, %v1167
      %v1169 = vpop.f32.mrf.mxu0
      %v1170 = vpop.f32.mrf.mxu0
      %v1171 = vadd.f32 %v1019, %v1170
      %v1172 = vpop.f32.mrf.mxu0
      %1173 = vmatprep.mubr.bf16.mxu0 0
      %1174 = vmatmul.mubr.bf16.gmra.mxu0 %v991
      %v1175 = vpop.f32.mrf.mxu0
      %v1176 = vadd.f32 %v1019, %v1175
      %v1177 = vpop.f32.mrf.mxu0
      %v1178 = vpop.f32.mrf.mxu0
      %v1179 = vadd.f32 %v1019, %v1178
      %v1180 = vpop.f32.mrf.mxu0
      %1181 = vmatprep.mubr.bf16.mxu0 0
      %1182 = vmatmul.mubr.bf16.gmra.mxu0 %v992
      %v1183 = vpop.f32.mrf.mxu0
      %v1184 = vadd.f32 %v1019, %v1183
      %v1185 = vpop.f32.mrf.mxu0
      %v1186 = vpop.f32.mrf.mxu0
      %v1187 = vadd.f32 %v1019, %v1186
      %v1188 = vpop.f32.mrf.mxu0
      %1189 = vmatprep.mubr.bf16.mxu0 0
      %1190 = vmatmul.mubr.bf16.gmra.mxu0 %v993
      %v1191 = vpop.f32.mrf.mxu0
      %v1192 = vadd.f32 %v1019, %v1191
      %v1193 = vpop.f32.mrf.mxu0
      %v1194 = vpop.f32.mrf.mxu0
      %v1195 = vadd.f32 %v1019, %v1194
      %v1196 = vpop.f32.mrf.mxu0
      %1197 = vmatprep.mubr.bf16.mxu0 0
      %1198 = vmatmul.mubr.bf16.gmra.mxu0 %v994
      %v1199 = vpop.f32.mrf.mxu0
      %v1200 = vadd.f32 %v1019, %v1199
      %v1201 = vpop.f32.mrf.mxu0
      %v1202 = vpop.f32.mrf.mxu0
      %v1203 = vadd.f32 %v1019, %v1202
      %v1204 = vpop.f32.mrf.mxu0
      %1205 = vmatprep.mubr.bf16.mxu0 0
      %1206 = vmatmul.mubr.bf16.gmra.mxu0 %v995
      %v1207 = vpop.f32.mrf.mxu0
      %v1208 = vadd.f32 %v1019, %v1207
      %v1209 = vpop.f32.mrf.mxu0
      %v1210 = vpop.f32.mrf.mxu0
      %v1211 = vadd.f32 %v1019, %v1210
      %v1212 = vpop.f32.mrf.mxu0
      %1213 = vmatprep.mubr.bf16.mxu0 0
      %1214 = vmatmul.mubr.bf16.gmra.mxu0 %v996
      %v1215 = vpop.f32.mrf.mxu0
      %v1216 = vadd.f32 %v1019, %v1215
      %v1217 = vpop.f32.mrf.mxu0
      %v1218 = vpop.f32.mrf.mxu0
      %v1219 = vadd.f32 %v1019, %v1218
      %v1220 = vpop.f32.mrf.mxu0
      %1221 = vmatprep.mubr.bf16.mxu0 0
      %1222 = vmatmul.mubr.bf16.gmra.mxu0 %v997
      %v1223 = vpop.f32.mrf.mxu0
      %v1224 = vadd.f32 %v1019, %v1223
      %v1225 = vpop.f32.mrf.mxu0
      %v1226 = vpop.f32.mrf.mxu0
      %v1227 = vadd.f32 %v1019, %v1226
      %v1228 = vpop.f32.mrf.mxu0
      %1229 = vdwg.mxu0
      %v1230 = vtanh.pop %v1104
      %v1231 = vtanh.pop %v1107
      %v1232 = vtanh.pop %v1112
      %v1233 = vtanh.pop %v1115
      %v1234 = vtanh.pop %v1120
      %v1235 = vtanh.pop %v1123
      %v1236 = vtanh.pop %v1128
      %v1237 = vtanh.pop %v1131
      %v1238 = vtanh.pop %v1136
      %v1239 = vtanh.pop %v1139
      %v1240 = vtanh.pop %v1144
      %v1241 = vtanh.pop %v1147
      %v1242 = vtanh.pop %v1152
      %v1243 = vtanh.pop %v1155
      %v1244 = vtanh.pop %v1160
      %v1245 = vtanh.pop %v1163
      %v1246 = vtanh.pop %v1168
      %v1247 = vtanh.pop %v1171
      %v1248 = vtanh.pop %v1176
      %v1249 = vtanh.pop %v1179
      %v1250 = vtanh.pop %v1184
      %v1251 = vtanh.pop %v1187
      %v1252 = vtanh.pop %v1192
      %v1253 = vtanh.pop %v1195
      %v1254 = vtanh.pop %v1200
      %v1255 = vtanh.pop %v1203
      %v1256 = vtanh.pop %v1208
      %v1257 = vtanh.pop %v1211
      %v1258 = vtanh.pop %v1216
      %v1259 = vtanh.pop %v1219
      %v1260 = vtanh.pop %v1224
      %v1261 = vtanh.pop %v1227
      %v1262 = vpack.c.bf16 %v1231, %v1230
      %v1263 = vpack.c.bf16 %v1233, %v1232
      %v1264 = vpack.c.bf16 %v1235, %v1234
      %v1265 = vpack.c.bf16 %v1237, %v1236
      %v1266 = vpack.c.bf16 %v1239, %v1238
      %v1267 = vpack.c.bf16 %v1241, %v1240
      %v1268 = vpack.c.bf16 %v1243, %v1242
      %v1269 = vpack.c.bf16 %v1245, %v1244
      %v1270 = vpack.c.bf16 %v1247, %v1246
      %v1271 = vpack.c.bf16 %v1249, %v1248
      %v1272 = vpack.c.bf16 %v1251, %v1250
      %v1273 = vpack.c.bf16 %v1253, %v1252
      %v1274 = vpack.c.bf16 %v1255, %v1254
      %v1275 = vpack.c.bf16 %v1257, %v1256
      %v1276 = vpack.c.bf16 %v1259, %v1258
      %v1277 = vpack.c.bf16 %v1261, %v1260
      %v1278 = vld [vmem:[%s5] sm:$0xf]
      %v1279 = vld [vmem:[%s5 + $0x4] sm:$0xf]
      %v1280 = vld [vmem:[%s5 + $0x8] sm:$0xf]
      %v1281 = vld [vmem:[%s5 + $0xc] sm:$0xf]
      %v1282 = vld [vmem:[%s5 + $0x10] sm:$0xf]
      %v1283 = vld [vmem:[%s5 + $0x14] sm:$0xf]
      %v1284 = vld [vmem:[%s5 + $0x18] sm:$0xf]
      %v1285 = vld [vmem:[%s5 + $0x1c] sm:$0xf]
      %v1286 = vld [vmem:[%s5 + $0x20] sm:$0xf]
      %v1287 = vld [vmem:[%s5 + $0x24] sm:$0xf]
      %v1288 = vld [vmem:[%s5 + $0x28] sm:$0xf]
      %v1289 = vld [vmem:[%s5 + $0x2c] sm:$0xf]
      %v1290 = vld [vmem:[%s5 + $0x30] sm:$0xf]
      %v1291 = vld [vmem:[%s5 + $0x34] sm:$0xf]
      %v1292 = vld [vmem:[%s5 + $0x38] sm:$0xf]
      %v1293 = vld [vmem:[%s5 + $0x3c] sm:$0xf]
      %v1294 = vld [vmem:[%s6] sm:$0x1]
      %v1296 = vlaneseq
      %v1297 = vshrl.u32 %v1296, 7
      %v1298 = vsub.s32 0, %v1297
      %v1299 = vrot.slane %v1294, %v1298
      %v1317 = vunpack.c.l.b16 %v1278
      %v1318 = vunpack.c.l.b16 %v1279
      %v1319 = vunpack.c.l.b16 %v1280
      %v1320 = vunpack.c.l.b16 %v1281
      %v1321 = vunpack.c.l.b16 %v1282
      %v1322 = vunpack.c.l.b16 %v1283
      %v1323 = vunpack.c.l.b16 %v1284
      %v1324 = vunpack.c.l.b16 %v1285
      %v1325 = vunpack.c.l.b16 %v1286
      %v1326 = vunpack.c.l.b16 %v1287
      %v1327 = vunpack.c.l.b16 %v1288
      %v1328 = vunpack.c.l.b16 %v1289
      %v1329 = vunpack.c.l.b16 %v1290
      %v1330 = vunpack.c.l.b16 %v1291
      %v1331 = vunpack.c.l.b16 %v1292
      %v1332 = vunpack.c.l.b16 %v1293
      %v1333 = vpack.c.b16 %v1318, %v1317
      %v1334 = vpack.c.b16 %v1320, %v1319
      %v1335 = vpack.c.b16 %v1322, %v1321
      %v1336 = vpack.c.b16 %v1324, %v1323
      %v1337 = vpack.c.b16 %v1326, %v1325
      %v1338 = vpack.c.b16 %v1328, %v1327
      %v1339 = vpack.c.b16 %v1330, %v1329
      %v1340 = vpack.c.b16 %v1332, %v1331
      %1349 = vmatprep.subr.bf16.mxu0 0
      %1350 = vmatpush1.bf16.msra.mxu0 %v1340
      %1351 = vmatprep.subr.bf16.mxu0 0
      %1352 = vmatpush1.bf16.msra.mxu0 %v1339
      %1353 = vmatprep.subr.bf16.mxu0 0
      %1354 = vmatpush1.bf16.msra.mxu0 %v1338
      %1355 = vmatprep.subr.bf16.mxu0 0
      %1356 = vmatpush1.bf16.msra.mxu0 %v1337
      %1357 = vmatprep.subr.bf16.mxu0 0
      %1358 = vmatpush1.bf16.msra.mxu0 %v1336
      %1359 = vmatprep.subr.bf16.mxu0 0
      %1360 = vmatpush1.bf16.msra.mxu0 %v1335
      %1361 = vmatprep.subr.bf16.mxu0 0
      %1362 = vmatpush1.bf16.msra.mxu0 %v1334
      %1363 = vmatprep.subr.bf16.mxu0 0
      %1364 = vmatpush1.bf16.msra.mxu0 %v1333
      %1365 = vmatprep.subr.bf16.mxu0 0
      %1366 = vmatpush2.bf16.msra.mxu0 0
      %1367 = vmatprep.subr.bf16.mxu0 0
      %1368 = vmatpush2.bf16.msra.mxu0 0
      %1369 = vmatprep.subr.bf16.mxu0 0
      %1370 = vmatpush2.bf16.msra.mxu0 0
      %1371 = vmatprep.subr.bf16.mxu0 0
      %1372 = vmatpush2.bf16.msra.mxu0 0
      %1373 = vmatprep.subr.bf16.mxu0 0
      %1374 = vmatpush2.bf16.msra.mxu0 0
      %1375 = vmatprep.subr.bf16.mxu0 0
      %1376 = vmatpush2.bf16.msra.mxu0 0
      %1377 = vmatprep.subr.bf16.mxu0 0
      %1378 = vmatpush2.bf16.msra.mxu0 0
      %1379 = vmatprep.subr.bf16.mxu0 0
      %1380 = vmatpush2.bf16.msra.mxu0 0
      %1381 = vmatprep.mubr.bf16.mxu0 0
      %1382 = vmatmul.mubr.bf16.gmra.mxu0 %v1262
      %v1383 = vpop.f32.mrf.mxu0
      %v1384 = vadd.f32 %v1299, %v1383
      %v1385 = vpop.f32.mrf.mxu0
      %v1386 = vpop.f32.mrf.mxu0
      %v1387 = vadd.f32 %v1299, %v1386
      %v1388 = vpop.f32.mrf.mxu0
      %1389 = vmatprep.mubr.bf16.mxu0 0
      %1390 = vmatmul.mubr.bf16.gmra.mxu0 %v1263
      %v1391 = vpop.f32.mrf.mxu0
      %v1392 = vadd.f32 %v1299, %v1391
      %v1393 = vpop.f32.mrf.mxu0
      %v1394 = vpop.f32.mrf.mxu0
      %v1395 = vadd.f32 %v1299, %v1394
      %v1396 = vpop.f32.mrf.mxu0
      %1397 = vmatprep.mubr.bf16.mxu0 0
      %1398 = vmatmul.mubr.bf16.gmra.mxu0 %v1264
      %v1399 = vpop.f32.mrf.mxu0
      %v1400 = vadd.f32 %v1299, %v1399
      %v1401 = vpop.f32.mrf.mxu0
      %v1402 = vpop.f32.mrf.mxu0
      %v1403 = vadd.f32 %v1299, %v1402
      %v1404 = vpop.f32.mrf.mxu0
      %1405 = vmatprep.mubr.bf16.mxu0 0
      %1406 = vmatmul.mubr.bf16.gmra.mxu0 %v1265
      %v1407 = vpop.f32.mrf.mxu0
      %v1408 = vadd.f32 %v1299, %v1407
      %v1409 = vpop.f32.mrf.mxu0
      %v1410 = vpop.f32.mrf.mxu0
      %v1411 = vadd.f32 %v1299, %v1410
      %v1412 = vpop.f32.mrf.mxu0
      %1413 = vmatprep.mubr.bf16.mxu0 0
      %1414 = vmatmul.mubr.bf16.gmra.mxu0 %v1266
      %v1415 = vpop.f32.mrf.mxu0
      %v1416 = vadd.f32 %v1299, %v1415
      %v1417 = vpop.f32.mrf.mxu0
      %v1418 = vpop.f32.mrf.mxu0
      %v1419 = vadd.f32 %v1299, %v1418
      %v1420 = vpop.f32.mrf.mxu0
      %1421 = vmatprep.mubr.bf16.mxu0 0
      %1422 = vmatmul.mubr.bf16.gmra.mxu0 %v1267
      %v1423 = vpop.f32.mrf.mxu0
      %v1424 = vadd.f32 %v1299, %v1423
      %v1425 = vpop.f32.mrf.mxu0
      %v1426 = vpop.f32.mrf.mxu0
      %v1427 = vadd.f32 %v1299, %v1426
      %v1428 = vpop.f32.mrf.mxu0
      %1429 = vmatprep.mubr.bf16.mxu0 0
      %1430 = vmatmul.mubr.bf16.gmra.mxu0 %v1268
      %v1431 = vpop.f32.mrf.mxu0
      %v1432 = vadd.f32 %v1299, %v1431
      %v1433 = vpop.f32.mrf.mxu0
      %v1434 = vpop.f32.mrf.mxu0
      %v1435 = vadd.f32 %v1299, %v1434
      %v1436 = vpop.f32.mrf.mxu0
      %1437 = vmatprep.mubr.bf16.mxu0 0
      %1438 = vmatmul.mubr.bf16.gmra.mxu0 %v1269
      %v1439 = vpop.f32.mrf.mxu0
      %v1440 = vadd.f32 %v1299, %v1439
      %v1441 = vpop.f32.mrf.mxu0
      %v1442 = vpop.f32.mrf.mxu0
      %v1443 = vadd.f32 %v1299, %v1442
      %v1444 = vpop.f32.mrf.mxu0
      %1445 = vmatprep.mubr.bf16.mxu0 0
      %1446 = vmatmul.mubr.bf16.gmra.mxu0 %v1270
      %v1447 = vpop.f32.mrf.mxu0
      %v1448 = vadd.f32 %v1299, %v1447
      %v1449 = vpop.f32.mrf.mxu0
      %v1450 = vpop.f32.mrf.mxu0
      %v1451 = vadd.f32 %v1299, %v1450
      %v1452 = vpop.f32.mrf.mxu0
      %1453 = vmatprep.mubr.bf16.mxu0 0
      %1454 = vmatmul.mubr.bf16.gmra.mxu0 %v1271
      %v1455 = vpop.f32.mrf.mxu0
      %v1456 = vadd.f32 %v1299, %v1455
      %v1457 = vpop.f32.mrf.mxu0
      %v1458 = vpop.f32.mrf.mxu0
      %v1459 = vadd.f32 %v1299, %v1458
      %v1460 = vpop.f32.mrf.mxu0
      %1461 = vmatprep.mubr.bf16.mxu0 0
      %1462 = vmatmul.mubr.bf16.gmra.mxu0 %v1272
      %v1463 = vpop.f32.mrf.mxu0
      %v1464 = vadd.f32 %v1299, %v1463
      %v1465 = vpop.f32.mrf.mxu0
      %v1466 = vpop.f32.mrf.mxu0
      %v1467 = vadd.f32 %v1299, %v1466
      %v1468 = vpop.f32.mrf.mxu0
      %1469 = vmatprep.mubr.bf16.mxu0 0
      %1470 = vmatmul.mubr.bf16.gmra.mxu0 %v1273
      %v1471 = vpop.f32.mrf.mxu0
      %v1472 = vadd.f32 %v1299, %v1471
      %v1473 = vpop.f32.mrf.mxu0
      %v1474 = vpop.f32.mrf.mxu0
      %v1475 = vadd.f32 %v1299, %v1474
      %v1476 = vpop.f32.mrf.mxu0
      %1477 = vmatprep.mubr.bf16.mxu0 0
      %1478 = vmatmul.mubr.bf16.gmra.mxu0 %v1274
      %v1479 = vpop.f32.mrf.mxu0
      %v1480 = vadd.f32 %v1299, %v1479
      %v1481 = vpop.f32.mrf.mxu0
      %v1482 = vpop.f32.mrf.mxu0
      %v1483 = vadd.f32 %v1299, %v1482
      %v1484 = vpop.f32.mrf.mxu0
      %1485 = vmatprep.mubr.bf16.mxu0 0
      %1486 = vmatmul.mubr.bf16.gmra.mxu0 %v1275
      %v1487 = vpop.f32.mrf.mxu0
      %v1488 = vadd.f32 %v1299, %v1487
      %v1489 = vpop.f32.mrf.mxu0
      %v1490 = vpop.f32.mrf.mxu0
      %v1491 = vadd.f32 %v1299, %v1490
      %v1492 = vpop.f32.mrf.mxu0
      %1493 = vmatprep.mubr.bf16.mxu0 0
      %1494 = vmatmul.mubr.bf16.gmra.mxu0 %v1276
      %v1495 = vpop.f32.mrf.mxu0
      %v1496 = vadd.f32 %v1299, %v1495
      %v1497 = vpop.f32.mrf.mxu0
      %v1498 = vpop.f32.mrf.mxu0
      %v1499 = vadd.f32 %v1299, %v1498
      %v1500 = vpop.f32.mrf.mxu0
      %1501 = vmatprep.mubr.bf16.mxu0 0
      %1502 = vmatmul.mubr.bf16.gmra.mxu0 %v1277
      %v1503 = vpop.f32.mrf.mxu0
      %v1504 = vadd.f32 %v1299, %v1503
      %v1505 = vpop.f32.mrf.mxu0
      %v1506 = vpop.f32.mrf.mxu0
      %v1507 = vadd.f32 %v1299, %v1506
      %v1508 = vpop.f32.mrf.mxu0
      %1509 = vdwg.mxu0
      %v1510 = vtanh.pop %v1384
      %v1511 = vtanh.pop %v1387
      %v1512 = vtanh.pop %v1392
      %v1513 = vtanh.pop %v1395
      %v1514 = vtanh.pop %v1400
      %v1515 = vtanh.pop %v1403
      %v1516 = vtanh.pop %v1408
      %v1517 = vtanh.pop %v1411
      %v1518 = vtanh.pop %v1416
      %v1519 = vtanh.pop %v1419
      %v1520 = vtanh.pop %v1424
      %v1521 = vtanh.pop %v1427
      %v1522 = vtanh.pop %v1432
      %v1523 = vtanh.pop %v1435
      %v1524 = vtanh.pop %v1440
      %v1525 = vtanh.pop %v1443
      %v1526 = vtanh.pop %v1448
      %v1527 = vtanh.pop %v1451
      %v1528 = vtanh.pop %v1456
      %v1529 = vtanh.pop %v1459
      %v1530 = vtanh.pop %v1464
      %v1531 = vtanh.pop %v1467
      %v1532 = vtanh.pop %v1472
      %v1533 = vtanh.pop %v1475
      %v1534 = vtanh.pop %v1480
      %v1535 = vtanh.pop %v1483
      %v1536 = vtanh.pop %v1488
      %v1537 = vtanh.pop %v1491
      %v1538 = vtanh.pop %v1496
      %v1539 = vtanh.pop %v1499
      %v1540 = vtanh.pop %v1504
      %v1541 = vtanh.pop %v1507
      %v1542 = vpack.c.bf16 %v1511, %v1510
      %v1543 = vpack.c.bf16 %v1513, %v1512
      %v1544 = vpack.c.bf16 %v1515, %v1514
      %v1545 = vpack.c.bf16 %v1517, %v1516
      %v1546 = vpack.c.bf16 %v1519, %v1518
      %v1547 = vpack.c.bf16 %v1521, %v1520
      %v1548 = vpack.c.bf16 %v1523, %v1522
      %v1549 = vpack.c.bf16 %v1525, %v1524
      %v1550 = vpack.c.bf16 %v1527, %v1526
      %v1551 = vpack.c.bf16 %v1529, %v1528
      %v1552 = vpack.c.bf16 %v1531, %v1530
      %v1553 = vpack.c.bf16 %v1533, %v1532
      %v1554 = vpack.c.bf16 %v1535, %v1534
      %v1555 = vpack.c.bf16 %v1537, %v1536
      %v1556 = vpack.c.bf16 %v1539, %v1538
      %v1557 = vpack.c.bf16 %v1541, %v1540
      %v1558 = vld [vmem:[%s7] sm:$0xf]
      %v1559 = vld [vmem:[%s7 + $0x4] sm:$0xf]
      %v1560 = vld [vmem:[%s7 + $0x8] sm:$0xf]
      %v1561 = vld [vmem:[%s7 + $0xc] sm:$0xf]
      %v1562 = vld [vmem:[%s7 + $0x10] sm:$0xf]
      %v1563 = vld [vmem:[%s7 + $0x14] sm:$0xf]
      %v1564 = vld [vmem:[%s7 + $0x18] sm:$0xf]
      %v1565 = vld [vmem:[%s7 + $0x1c] sm:$0xf]
      %v1566 = vld [vmem:[%s7 + $0x20] sm:$0xf]
      %v1567 = vld [vmem:[%s7 + $0x24] sm:$0xf]
      %v1568 = vld [vmem:[%s7 + $0x28] sm:$0xf]
      %v1569 = vld [vmem:[%s7 + $0x2c] sm:$0xf]
      %v1570 = vld [vmem:[%s7 + $0x30] sm:$0xf]
      %v1571 = vld [vmem:[%s7 + $0x34] sm:$0xf]
      %v1572 = vld [vmem:[%s7 + $0x38] sm:$0xf]
      %v1573 = vld [vmem:[%s7 + $0x3c] sm:$0xf]
      %v1574 = vld [vmem:[%s8] sm:$0x1]
      %v1576 = vlaneseq
      %v1577 = vshrl.u32 %v1576, 7
      %v1578 = vsub.s32 0, %v1577
      %v1579 = vrot.slane %v1574, %v1578
      %v1597 = vunpack.c.l.b16 %v1558
      %v1598 = vunpack.c.l.b16 %v1559
      %v1599 = vunpack.c.l.b16 %v1560
      %v1600 = vunpack.c.l.b16 %v1561
      %v1601 = vunpack.c.l.b16 %v1562
      %v1602 = vunpack.c.l.b16 %v1563
      %v1603 = vunpack.c.l.b16 %v1564
      %v1604 = vunpack.c.l.b16 %v1565
      %v1605 = vunpack.c.l.b16 %v1566
      %v1606 = vunpack.c.l.b16 %v1567
      %v1607 = vunpack.c.l.b16 %v1568
      %v1608 = vunpack.c.l.b16 %v1569
      %v1609 = vunpack.c.l.b16 %v1570
      %v1610 = vunpack.c.l.b16 %v1571
      %v1611 = vunpack.c.l.b16 %v1572
      %v1612 = vunpack.c.l.b16 %v1573
      %v1613 = vpack.c.b16 %v1598, %v1597
      %v1614 = vpack.c.b16 %v1600, %v1599
      %v1615 = vpack.c.b16 %v1602, %v1601
      %v1616 = vpack.c.b16 %v1604, %v1603
      %v1617 = vpack.c.b16 %v1606, %v1605
      %v1618 = vpack.c.b16 %v1608, %v1607
      %v1619 = vpack.c.b16 %v1610, %v1609
      %v1620 = vpack.c.b16 %v1612, %v1611
      %1629 = vmatprep.subr.bf16.mxu0 0
      %1630 = vmatpush1.bf16.msra.mxu0 %v1620
      %1631 = vmatprep.subr.bf16.mxu0 0
      %1632 = vmatpush1.bf16.msra.mxu0 %v1619
      %1633 = vmatprep.subr.bf16.mxu0 0
      %1634 = vmatpush1.bf16.msra.mxu0 %v1618
      %1635 = vmatprep.subr.bf16.mxu0 0
      %1636 = vmatpush1.bf16.msra.mxu0 %v1617
      %1637 = vmatprep.subr.bf16.mxu0 0
      %1638 = vmatpush1.bf16.msra.mxu0 %v1616
      %1639 = vmatprep.subr.bf16.mxu0 0
      %1640 = vmatpush1.bf16.msra.mxu0 %v1615
      %1641 = vmatprep.subr.bf16.mxu0 0
      %1642 = vmatpush1.bf16.msra.mxu0 %v1614
      %1643 = vmatprep.subr.bf16.mxu0 0
      %1644 = vmatpush1.bf16.msra.mxu0 %v1613
      %1645 = vmatprep.subr.bf16.mxu0 0
      %1646 = vmatpush2.bf16.msra.mxu0 0
      %1647 = vmatprep.subr.bf16.mxu0 0
      %1648 = vmatpush2.bf16.msra.mxu0 0
      %1649 = vmatprep.subr.bf16.mxu0 0
      %1650 = vmatpush2.bf16.msra.mxu0 0
      %1651 = vmatprep.subr.bf16.mxu0 0
      %1652 = vmatpush2.bf16.msra.mxu0 0
      %1653 = vmatprep.subr.bf16.mxu0 0
      %1654 = vmatpush2.bf16.msra.mxu0 0
      %1655 = vmatprep.subr.bf16.mxu0 0
      %1656 = vmatpush2.bf16.msra.mxu0 0
      %1657 = vmatprep.subr.bf16.mxu0 0
      %1658 = vmatpush2.bf16.msra.mxu0 0
      %1659 = vmatprep.subr.bf16.mxu0 0
      %1660 = vmatpush2.bf16.msra.mxu0 0
      %1661 = vmatprep.mubr.bf16.mxu0 0
      %1662 = vmatmul.mubr.bf16.gmra.mxu0 %v1542
      %v1663 = vpop.f32.mrf.mxu0
      %v1664 = vadd.f32 %v1579, %v1663
      %v1665 = vpop.f32.mrf.mxu0
      %v1666 = vpop.f32.mrf.mxu0
      %v1667 = vadd.f32 %v1579, %v1666
      %v1668 = vpop.f32.mrf.mxu0
      %1669 = vmatprep.mubr.bf16.mxu0 0
      %1670 = vmatmul.mubr.bf16.gmra.mxu0 %v1543
      %v1671 = vpop.f32.mrf.mxu0
      %v1672 = vadd.f32 %v1579, %v1671
      %v1673 = vpop.f32.mrf.mxu0
      %v1674 = vpop.f32.mrf.mxu0
      %v1675 = vadd.f32 %v1579, %v1674
      %v1676 = vpop.f32.mrf.mxu0
      %1677 = vmatprep.mubr.bf16.mxu0 0
      %1678 = vmatmul.mubr.bf16.gmra.mxu0 %v1544
      %v1679 = vpop.f32.mrf.mxu0
      %v1680 = vadd.f32 %v1579, %v1679
      %v1681 = vpop.f32.mrf.mxu0
      %v1682 = vpop.f32.mrf.mxu0
      %v1683 = vadd.f32 %v1579, %v1682
      %v1684 = vpop.f32.mrf.mxu0
      %1685 = vmatprep.mubr.bf16.mxu0 0
      %1686 = vmatmul.mubr.bf16.gmra.mxu0 %v1545
      %v1687 = vpop.f32.mrf.mxu0
      %v1688 = vadd.f32 %v1579, %v1687
      %v1689 = vpop.f32.mrf.mxu0
      %v1690 = vpop.f32.mrf.mxu0
      %v1691 = vadd.f32 %v1579, %v1690
      %v1692 = vpop.f32.mrf.mxu0
      %1693 = vmatprep.mubr.bf16.mxu0 0
      %1694 = vmatmul.mubr.bf16.gmra.mxu0 %v1546
      %v1695 = vpop.f32.mrf.mxu0
      %v1696 = vadd.f32 %v1579, %v1695
      %v1697 = vpop.f32.mrf.mxu0
      %v1698 = vpop.f32.mrf.mxu0
      %v1699 = vadd.f32 %v1579, %v1698
      %v1700 = vpop.f32.mrf.mxu0
      %1701 = vmatprep.mubr.bf16.mxu0 0
      %1702 = vmatmul.mubr.bf16.gmra.mxu0 %v1547
      %v1703 = vpop.f32.mrf.mxu0
      %v1704 = vadd.f32 %v1579, %v1703
      %v1705 = vpop.f32.mrf.mxu0
      %v1706 = vpop.f32.mrf.mxu0
      %v1707 = vadd.f32 %v1579, %v1706
      %v1708 = vpop.f32.mrf.mxu0
      %1709 = vmatprep.mubr.bf16.mxu0 0
      %1710 = vmatmul.mubr.bf16.gmra.mxu0 %v1548
      %v1711 = vpop.f32.mrf.mxu0
      %v1712 = vadd.f32 %v1579, %v1711
      %v1713 = vpop.f32.mrf.mxu0
      %v1714 = vpop.f32.mrf.mxu0
      %v1715 = vadd.f32 %v1579, %v1714
      %v1716 = vpop.f32.mrf.mxu0
      %1717 = vmatprep.mubr.bf16.mxu0 0
      %1718 = vmatmul.mubr.bf16.gmra.mxu0 %v1549
      %v1719 = vpop.f32.mrf.mxu0
      %v1720 = vadd.f32 %v1579, %v1719
      %v1721 = vpop.f32.mrf.mxu0
      %v1722 = vpop.f32.mrf.mxu0
      %v1723 = vadd.f32 %v1579, %v1722
      %v1724 = vpop.f32.mrf.mxu0
      %1725 = vmatprep.mubr.bf16.mxu0 0
      %1726 = vmatmul.mubr.bf16.gmra.mxu0 %v1550
      %v1727 = vpop.f32.mrf.mxu0
      %v1728 = vadd.f32 %v1579, %v1727
      %v1729 = vpop.f32.mrf.mxu0
      %v1730 = vpop.f32.mrf.mxu0
      %v1731 = vadd.f32 %v1579, %v1730
      %v1732 = vpop.f32.mrf.mxu0
      %1733 = vmatprep.mubr.bf16.mxu0 0
      %1734 = vmatmul.mubr.bf16.gmra.mxu0 %v1551
      %v1735 = vpop.f32.mrf.mxu0
      %v1736 = vadd.f32 %v1579, %v1735
      %v1737 = vpop.f32.mrf.mxu0
      %v1738 = vpop.f32.mrf.mxu0
      %v1739 = vadd.f32 %v1579, %v1738
      %v1740 = vpop.f32.mrf.mxu0
      %1741 = vmatprep.mubr.bf16.mxu0 0
      %1742 = vmatmul.mubr.bf16.gmra.mxu0 %v1552
      %v1743 = vpop.f32.mrf.mxu0
      %v1744 = vadd.f32 %v1579, %v1743
      %v1745 = vpop.f32.mrf.mxu0
      %v1746 = vpop.f32.mrf.mxu0
      %v1747 = vadd.f32 %v1579, %v1746
      %v1748 = vpop.f32.mrf.mxu0
      %1749 = vmatprep.mubr.bf16.mxu0 0
      %1750 = vmatmul.mubr.bf16.gmra.mxu0 %v1553
      %v1751 = vpop.f32.mrf.mxu0
      %v1752 = vadd.f32 %v1579, %v1751
      %v1753 = vpop.f32.mrf.mxu0
      %v1754 = vpop.f32.mrf.mxu0
      %v1755 = vadd.f32 %v1579, %v1754
      %v1756 = vpop.f32.mrf.mxu0
      %1757 = vmatprep.mubr.bf16.mxu0 0
      %1758 = vmatmul.mubr.bf16.gmra.mxu0 %v1554
      %v1759 = vpop.f32.mrf.mxu0
      %v1760 = vadd.f32 %v1579, %v1759
      %v1761 = vpop.f32.mrf.mxu0
      %v1762 = vpop.f32.mrf.mxu0
      %v1763 = vadd.f32 %v1579, %v1762
      %v1764 = vpop.f32.mrf.mxu0
      %1765 = vmatprep.mubr.bf16.mxu0 0
      %1766 = vmatmul.mubr.bf16.gmra.mxu0 %v1555
      %v1767 = vpop.f32.mrf.mxu0
      %v1768 = vadd.f32 %v1579, %v1767
      %v1769 = vpop.f32.mrf.mxu0
      %v1770 = vpop.f32.mrf.mxu0
      %v1771 = vadd.f32 %v1579, %v1770
      %v1772 = vpop.f32.mrf.mxu0
      %1773 = vmatprep.mubr.bf16.mxu0 0
      %1774 = vmatmul.mubr.bf16.gmra.mxu0 %v1556
      %v1775 = vpop.f32.mrf.mxu0
      %v1776 = vadd.f32 %v1579, %v1775
      %v1777 = vpop.f32.mrf.mxu0
      %v1778 = vpop.f32.mrf.mxu0
      %v1779 = vadd.f32 %v1579, %v1778
      %v1780 = vpop.f32.mrf.mxu0
      %1781 = vmatprep.mubr.bf16.mxu0 0
      %1782 = vmatmul.mubr.bf16.gmra.mxu0 %v1557
      %v1783 = vpop.f32.mrf.mxu0
      %v1784 = vadd.f32 %v1579, %v1783
      %v1785 = vpop.f32.mrf.mxu0
      %v1786 = vpop.f32.mrf.mxu0
      %v1787 = vadd.f32 %v1579, %v1786
      %v1788 = vpop.f32.mrf.mxu0
      %1789 = vdwg.mxu0
      %v1790 = vtanh.pop %v1664
      %v1791 = vtanh.pop %v1667
      %v1792 = vtanh.pop %v1672
      %v1793 = vtanh.pop %v1675
      %v1794 = vtanh.pop %v1680
      %v1795 = vtanh.pop %v1683
      %v1796 = vtanh.pop %v1688
      %v1797 = vtanh.pop %v1691
      %v1798 = vtanh.pop %v1696
      %v1799 = vtanh.pop %v1699
      %v1800 = vtanh.pop %v1704
      %v1801 = vtanh.pop %v1707
      %v1802 = vtanh.pop %v1712
      %v1803 = vtanh.pop %v1715
      %v1804 = vtanh.pop %v1720
      %v1805 = vtanh.pop %v1723
      %v1806 = vtanh.pop %v1728
      %v1807 = vtanh.pop %v1731
      %v1808 = vtanh.pop %v1736
      %v1809 = vtanh.pop %v1739
      %v1810 = vtanh.pop %v1744
      %v1811 = vtanh.pop %v1747
      %v1812 = vtanh.pop %v1752
      %v1813 = vtanh.pop %v1755
      %v1814 = vtanh.pop %v1760
      %v1815 = vtanh.pop %v1763
      %v1816 = vtanh.pop %v1768
      %v1817 = vtanh.pop %v1771
      %v1818 = vtanh.pop %v1776
      %v1819 = vtanh.pop %v1779
      %v1820 = vtanh.pop %v1784
      %v1821 = vtanh.pop %v1787
      %v1822 = vpack.c.bf16 %v1791, %v1790
      %v1823 = vpack.c.bf16 %v1793, %v1792
      %v1824 = vpack.c.bf16 %v1795, %v1794
      %v1825 = vpack.c.bf16 %v1797, %v1796
      %v1826 = vpack.c.bf16 %v1799, %v1798
      %v1827 = vpack.c.bf16 %v1801, %v1800
      %v1828 = vpack.c.bf16 %v1803, %v1802
      %v1829 = vpack.c.bf16 %v1805, %v1804
      %v1830 = vpack.c.bf16 %v1807, %v1806
      %v1831 = vpack.c.bf16 %v1809, %v1808
      %v1832 = vpack.c.bf16 %v1811, %v1810
      %v1833 = vpack.c.bf16 %v1813, %v1812
      %v1834 = vpack.c.bf16 %v1815, %v1814
      %v1835 = vpack.c.bf16 %v1817, %v1816
      %v1836 = vpack.c.bf16 %v1819, %v1818
      %v1837 = vpack.c.bf16 %v1821, %v1820
      %v1838 = vld [vmem:[%s9] sm:$0xf]
      %v1839 = vld [vmem:[%s9 + $0x4] sm:$0xf]
      %v1840 = vld [vmem:[%s9 + $0x8] sm:$0xf]
      %v1841 = vld [vmem:[%s9 + $0xc] sm:$0xf]
      %v1842 = vld [vmem:[%s9 + $0x10] sm:$0xf]
      %v1843 = vld [vmem:[%s9 + $0x14] sm:$0xf]
      %v1844 = vld [vmem:[%s9 + $0x18] sm:$0xf]
      %v1845 = vld [vmem:[%s9 + $0x1c] sm:$0xf]
      %v1846 = vld [vmem:[%s10] sm:$0x1]
      %v1848 = vlaneseq
      %v1849 = vshrl.u32 %v1848, 7
      %v1850 = vsub.s32 0, %v1849
      %v1851 = vrot.slane %v1846, %v1850
      %v1861 = vunpack.c.l.b16 %v1838
      %v1862 = vunpack.c.l.b16 %v1839
      %v1863 = vunpack.c.l.b16 %v1840
      %v1864 = vunpack.c.l.b16 %v1841
      %v1865 = vunpack.c.l.b16 %v1842
      %v1866 = vunpack.c.l.b16 %v1843
      %v1867 = vunpack.c.l.b16 %v1844
      %v1868 = vunpack.c.l.b16 %v1845
      %v1869 = vpack.c.b16 %v1862, %v1861
      %v1870 = vpack.c.b16 %v1864, %v1863
      %v1871 = vpack.c.b16 %v1866, %v1865
      %v1872 = vpack.c.b16 %v1868, %v1867
      %vm1877 = vcmask 523264
      %v1879 = vsel %vm1877, %v1822, 0
      %v1882 = vsel %vm1877, %v1823, 0
      %v1885 = vsel %vm1877, %v1824, 0
      %v1888 = vsel %vm1877, %v1825, 0
      %v1891 = vsel %vm1877, %v1826, 0
      %v1894 = vsel %vm1877, %v1827, 0
      %v1897 = vsel %vm1877, %v1828, 0
      %v1900 = vsel %vm1877, %v1829, 0
      %v1903 = vsel %vm1877, %v1830, 0
      %v1906 = vsel %vm1877, %v1831, 0
      %v1909 = vsel %vm1877, %v1832, 0
      %v1912 = vsel %vm1877, %v1833, 0
      %v1915 = vsel %vm1877, %v1834, 0
      %v1918 = vsel %vm1877, %v1835, 0
      %v1921 = vsel %vm1877, %v1836, 0
      %v1924 = vsel %vm1877, %v1837, 0
      %1926 = vmatprep.subr.bf16.mxu0 0
      %1927 = vmatpush1.bf16.msra.mxu0 0
      %1928 = vmatprep.subr.bf16.mxu0 0
      %1929 = vmatpush1.bf16.msra.mxu0 0
      %1930 = vmatprep.subr.bf16.mxu0 0
      %1931 = vmatpush1.bf16.msra.mxu0 0
      %1932 = vmatprep.subr.bf16.mxu0 0
      %1933 = vmatpush1.bf16.msra.mxu0 0
      %1934 = vmatprep.subr.bf16.mxu0 0
      %1935 = vmatpush1.bf16.msra.mxu0 %v1872
      %1936 = vmatprep.subr.bf16.mxu0 0
      %1937 = vmatpush1.bf16.msra.mxu0 %v1871
      %1938 = vmatprep.subr.bf16.mxu0 0
      %1939 = vmatpush1.bf16.msra.mxu0 %v1870
      %1940 = vmatprep.subr.bf16.mxu0 0
      %1941 = vmatpush1.bf16.msra.mxu0 %v1869
      %1942 = vmatprep.subr.bf16.mxu0 0
      %1943 = vmatpush2.bf16.msra.mxu0 0
      %1944 = vmatprep.subr.bf16.mxu0 0
      %1945 = vmatpush2.bf16.msra.mxu0 0
      %1946 = vmatprep.subr.bf16.mxu0 0
      %1947 = vmatpush2.bf16.msra.mxu0 0
      %1948 = vmatprep.subr.bf16.mxu0 0
      %1949 = vmatpush2.bf16.msra.mxu0 0
      %1950 = vmatprep.subr.bf16.mxu0 0
      %1951 = vmatpush2.bf16.msra.mxu0 0
      %1952 = vmatprep.subr.bf16.mxu0 0
      %1953 = vmatpush2.bf16.msra.mxu0 0
      %1954 = vmatprep.subr.bf16.mxu0 0
      %1955 = vmatpush2.bf16.msra.mxu0 0
      %1956 = vmatprep.subr.bf16.mxu0 0
      %1957 = vmatpush2.bf16.msra.mxu0 0
      %1958 = vmatprep.mubr.bf16.mxu0 0
      %1959 = vmatmul.mubr.bf16.gmra.mxu0 %v1879
      %v1960 = vpop.f32.mrf.mxu0
      %v1961 = vadd.f32 %v1851, %v1960
      %v1962 = vpop.f32.mrf.mxu0
      %v1963 = vpop.f32.mrf.mxu0
      %v1964 = vadd.f32 %v1851, %v1963
      %v1965 = vpop.f32.mrf.mxu0
      %1966 = vmatprep.mubr.bf16.mxu0 0
      %1967 = vmatmul.mubr.bf16.gmra.mxu0 %v1882
      %v1968 = vpop.f32.mrf.mxu0
      %v1969 = vadd.f32 %v1851, %v1968
      %v1970 = vpop.f32.mrf.mxu0
      %v1971 = vpop.f32.mrf.mxu0
      %v1972 = vadd.f32 %v1851, %v1971
      %v1973 = vpop.f32.mrf.mxu0
      %1974 = vmatprep.mubr.bf16.mxu0 0
      %1975 = vmatmul.mubr.bf16.gmra.mxu0 %v1885
      %v1976 = vpop.f32.mrf.mxu0
      %v1977 = vadd.f32 %v1851, %v1976
      %v1978 = vpop.f32.mrf.mxu0
      %v1979 = vpop.f32.mrf.mxu0
      %v1980 = vadd.f32 %v1851, %v1979
      %v1981 = vpop.f32.mrf.mxu0
      %1982 = vmatprep.mubr.bf16.mxu0 0
      %1983 = vmatmul.mubr.bf16.gmra.mxu0 %v1888
      %v1984 = vpop.f32.mrf.mxu0
      %v1985 = vadd.f32 %v1851, %v1984
      %v1986 = vpop.f32.mrf.mxu0
      %v1987 = vpop.f32.mrf.mxu0
      %v1988 = vadd.f32 %v1851, %v1987
      %v1989 = vpop.f32.mrf.mxu0
      %1990 = vmatprep.mubr.bf16.mxu0 0
      %1991 = vmatmul.mubr.bf16.gmra.mxu0 %v1891
      %v1992 = vpop.f32.mrf.mxu0
      %v1993 = vadd.f32 %v1851, %v1992
      %v1994 = vpop.f32.mrf.mxu0
      %v1995 = vpop.f32.mrf.mxu0
      %v1996 = vadd.f32 %v1851, %v1995
      %v1997 = vpop.f32.mrf.mxu0
      %1998 = vmatprep.mubr.bf16.mxu0 0
      %1999 = vmatmul.mubr.bf16.gmra.mxu0 %v1894
      %v2000 = vpop.f32.mrf.mxu0
      %v2001 = vadd.f32 %v1851, %v2000
      %v2002 = vpop.f32.mrf.mxu0
      %v2003 = vpop.f32.mrf.mxu0
      %v2004 = vadd.f32 %v1851, %v2003
      %v2005 = vpop.f32.mrf.mxu0
      %2006 = vmatprep.mubr.bf16.mxu0 0
      %2007 = vmatmul.mubr.bf16.gmra.mxu0 %v1897
      %v2008 = vpop.f32.mrf.mxu0
      %v2009 = vadd.f32 %v1851, %v2008
      %v2010 = vpop.f32.mrf.mxu0
      %v2011 = vpop.f32.mrf.mxu0
      %v2012 = vadd.f32 %v1851, %v2011
      %v2013 = vpop.f32.mrf.mxu0
      %2014 = vmatprep.mubr.bf16.mxu0 0
      %2015 = vmatmul.mubr.bf16.gmra.mxu0 %v1900
      %v2016 = vpop.f32.mrf.mxu0
      %v2017 = vadd.f32 %v1851, %v2016
      %v2018 = vpop.f32.mrf.mxu0
      %v2019 = vpop.f32.mrf.mxu0
      %v2020 = vadd.f32 %v1851, %v2019
      %v2021 = vpop.f32.mrf.mxu0
      %2022 = vmatprep.mubr.bf16.mxu0 0
      %2023 = vmatmul.mubr.bf16.gmra.mxu0 %v1903
      %v2024 = vpop.f32.mrf.mxu0
      %v2025 = vadd.f32 %v1851, %v2024
      %v2026 = vpop.f32.mrf.mxu0
      %v2027 = vpop.f32.mrf.mxu0
      %v2028 = vadd.f32 %v1851, %v2027
      %v2029 = vpop.f32.mrf.mxu0
      %2030 = vmatprep.mubr.bf16.mxu0 0
      %2031 = vmatmul.mubr.bf16.gmra.mxu0 %v1906
      %v2032 = vpop.f32.mrf.mxu0
      %v2033 = vadd.f32 %v1851, %v2032
      %v2034 = vpop.f32.mrf.mxu0
      %v2035 = vpop.f32.mrf.mxu0
      %v2036 = vadd.f32 %v1851, %v2035
      %v2037 = vpop.f32.mrf.mxu0
      %2038 = vmatprep.mubr.bf16.mxu0 0
      %2039 = vmatmul.mubr.bf16.gmra.mxu0 %v1909
      %v2040 = vpop.f32.mrf.mxu0
      %v2041 = vadd.f32 %v1851, %v2040
      %v2042 = vpop.f32.mrf.mxu0
      %v2043 = vpop.f32.mrf.mxu0
      %v2044 = vadd.f32 %v1851, %v2043
      %v2045 = vpop.f32.mrf.mxu0
      %2046 = vmatprep.mubr.bf16.mxu0 0
      %2047 = vmatmul.mubr.bf16.gmra.mxu0 %v1912
      %v2048 = vpop.f32.mrf.mxu0
      %v2049 = vadd.f32 %v1851, %v2048
      %v2050 = vpop.f32.mrf.mxu0
      %v2051 = vpop.f32.mrf.mxu0
      %v2052 = vadd.f32 %v1851, %v2051
      %v2053 = vpop.f32.mrf.mxu0
      %2054 = vmatprep.mubr.bf16.mxu0 0
      %2055 = vmatmul.mubr.bf16.gmra.mxu0 %v1915
      %v2056 = vpop.f32.mrf.mxu0
      %v2057 = vadd.f32 %v1851, %v2056
      %v2058 = vpop.f32.mrf.mxu0
      %v2059 = vpop.f32.mrf.mxu0
      %v2060 = vadd.f32 %v1851, %v2059
      %v2061 = vpop.f32.mrf.mxu0
      %2062 = vmatprep.mubr.bf16.mxu0 0
      %2063 = vmatmul.mubr.bf16.gmra.mxu0 %v1918
      %v2064 = vpop.f32.mrf.mxu0
      %v2065 = vadd.f32 %v1851, %v2064
      %v2066 = vpop.f32.mrf.mxu0
      %v2067 = vpop.f32.mrf.mxu0
      %v2068 = vadd.f32 %v1851, %v2067
      %v2069 = vpop.f32.mrf.mxu0
      %2070 = vmatprep.mubr.bf16.mxu0 0
      %2071 = vmatmul.mubr.bf16.gmra.mxu0 %v1921
      %v2072 = vpop.f32.mrf.mxu0
      %v2073 = vadd.f32 %v1851, %v2072
      %v2074 = vpop.f32.mrf.mxu0
      %v2075 = vpop.f32.mrf.mxu0
      %v2076 = vadd.f32 %v1851, %v2075
      %v2077 = vpop.f32.mrf.mxu0
      %2078 = vmatprep.mubr.bf16.mxu0 0
      %2079 = vmatmul.mubr.bf16.gmra.mxu0 %v1924
      %v2080 = vpop.f32.mrf.mxu0
      %v2081 = vadd.f32 %v1851, %v2080
      %v2082 = vpop.f32.mrf.mxu0
      %v2083 = vpop.f32.mrf.mxu0
      %v2084 = vadd.f32 %v1851, %v2083
      %v2085 = vpop.f32.mrf.mxu0
      %2086 = vdwg.mxu0
      %v2087 = vtanh.pop %v1961
      %v2088 = vtanh.pop %v1964
      %v2089 = vtanh.pop %v1969
      %v2090 = vtanh.pop %v1972
      %v2091 = vtanh.pop %v1977
      %v2092 = vtanh.pop %v1980
      %v2093 = vtanh.pop %v1985
      %v2094 = vtanh.pop %v1988
      %v2095 = vtanh.pop %v1993
      %v2096 = vtanh.pop %v1996
      %v2097 = vtanh.pop %v2001
      %v2098 = vtanh.pop %v2004
      %v2099 = vtanh.pop %v2009
      %v2100 = vtanh.pop %v2012
      %v2101 = vtanh.pop %v2017
      %v2102 = vtanh.pop %v2020
      %v2103 = vtanh.pop %v2025
      %v2104 = vtanh.pop %v2028
      %v2105 = vtanh.pop %v2033
      %v2106 = vtanh.pop %v2036
      %v2107 = vtanh.pop %v2041
      %v2108 = vtanh.pop %v2044
      %v2109 = vtanh.pop %v2049
      %v2110 = vtanh.pop %v2052
      %v2111 = vtanh.pop %v2057
      %v2112 = vtanh.pop %v2060
      %v2113 = vtanh.pop %v2065
      %v2114 = vtanh.pop %v2068
      %v2115 = vtanh.pop %v2073
      %v2116 = vtanh.pop %v2076
      %v2117 = vtanh.pop %v2081
      %v2118 = vtanh.pop %v2084
      %v2119 = vpack.c.bf16 %v2088, %v2087
      %v2120 = vpack.c.bf16 %v2090, %v2089
      %v2121 = vpack.c.bf16 %v2092, %v2091
      %v2122 = vpack.c.bf16 %v2094, %v2093
      %v2123 = vpack.c.bf16 %v2096, %v2095
      %v2124 = vpack.c.bf16 %v2098, %v2097
      %v2125 = vpack.c.bf16 %v2100, %v2099
      %v2126 = vpack.c.bf16 %v2102, %v2101
      %v2127 = vpack.c.bf16 %v2104, %v2103
      %v2128 = vpack.c.bf16 %v2106, %v2105
      %v2129 = vpack.c.bf16 %v2108, %v2107
      %v2130 = vpack.c.bf16 %v2110, %v2109
      %v2131 = vpack.c.bf16 %v2112, %v2111
      %v2132 = vpack.c.bf16 %v2114, %v2113
      %v2133 = vpack.c.bf16 %v2116, %v2115
      %v2134 = vpack.c.bf16 %v2118, %v2117
      %v2135 = vld [vmem:[%s11] sm:$0xf]
      %v2136 = vld [vmem:[%s11 + $0x4] sm:$0xf]
      %v2137 = vld [vmem:[%s11 + $0x8] sm:$0xf]
      %v2138 = vld [vmem:[%s11 + $0xc] sm:$0xf]
      %v2139 = vld [vmem:[%s11 + $0x10] sm:$0xf]
      %v2140 = vld [vmem:[%s11 + $0x14] sm:$0xf]
      %v2141 = vld [vmem:[%s11 + $0x18] sm:$0xf]
      %v2142 = vld [vmem:[%s11 + $0x1c] sm:$0xf]
      %v2143 = vld [vmem:[%s11 + $0x20] sm:$0xf]
      %v2144 = vld [vmem:[%s11 + $0x24] sm:$0xf]
      %v2145 = vld [vmem:[%s11 + $0x28] sm:$0xf]
      %v2146 = vld [vmem:[%s11 + $0x2c] sm:$0xf]
      %v2147 = vld [vmem:[%s12] sm:$0x1]
      %v2149 = vlaneseq
      %v2150 = vshrl.u32 %v2149, 7
      %v2151 = vsub.s32 0, %v2150
      %v2152 = vrot.slane %v2147, %v2151
      %v2166 = vunpack.c.l.b16 %v2135
      %v2167 = vunpack.c.l.b16 %v2136
      %v2168 = vunpack.c.l.b16 %v2137
      %v2169 = vunpack.c.l.b16 %v2138
      %v2170 = vunpack.c.l.b16 %v2139
      %v2171 = vunpack.c.l.b16 %v2140
      %v2172 = vunpack.c.l.b16 %v2141
      %v2173 = vunpack.c.l.b16 %v2142
      %v2174 = vunpack.c.l.b16 %v2143
      %v2175 = vunpack.c.l.b16 %v2144
      %v2176 = vunpack.c.l.b16 %v2145
      %v2177 = vunpack.c.l.b16 %v2146
      %v2178 = vpack.c.b16 %v2167, %v2166
      %v2179 = vpack.c.b16 %v2169, %v2168
      %v2180 = vpack.c.b16 %v2171, %v2170
      %v2181 = vpack.c.b16 %v2173, %v2172
      %v2182 = vpack.c.b16 %v2175, %v2174
      %v2183 = vpack.c.b16 %v2177, %v2176
      %vm2190 = vcmask 785408
      %v2192 = vsel %vm2190, %v2119, 0
      %v2195 = vsel %vm2190, %v2120, 0
      %v2198 = vsel %vm2190, %v2121, 0
      %v2201 = vsel %vm2190, %v2122, 0
      %v2204 = vsel %vm2190, %v2123, 0
      %v2207 = vsel %vm2190, %v2124, 0
      %v2210 = vsel %vm2190, %v2125, 0
      %v2213 = vsel %vm2190, %v2126, 0
      %v2216 = vsel %vm2190, %v2127, 0
      %v2219 = vsel %vm2190, %v2128, 0
      %v2222 = vsel %vm2190, %v2129, 0
      %v2225 = vsel %vm2190, %v2130, 0
      %v2228 = vsel %vm2190, %v2131, 0
      %v2231 = vsel %vm2190, %v2132, 0
      %v2234 = vsel %vm2190, %v2133, 0
      %v2237 = vsel %vm2190, %v2134, 0
      %2239 = vmatprep.subr.bf16.mxu0 0
      %2240 = vmatpush1.bf16.msra.mxu0 0
      %2241 = vmatprep.subr.bf16.mxu0 0
      %2242 = vmatpush1.bf16.msra.mxu0 0
      %2243 = vmatprep.subr.bf16.mxu0 0
      %2244 = vmatpush1.bf16.msra.mxu0 %v2183
      %2245 = vmatprep.subr.bf16.mxu0 0
      %2246 = vmatpush1.bf16.msra.mxu0 %v2182
      %2247 = vmatprep.subr.bf16.mxu0 0
      %2248 = vmatpush1.bf16.msra.mxu0 %v2181
      %2249 = vmatprep.subr.bf16.mxu0 0
      %2250 = vmatpush1.bf16.msra.mxu0 %v2180
      %2251 = vmatprep.subr.bf16.mxu0 0
      %2252 = vmatpush1.bf16.msra.mxu0 %v2179
      %2253 = vmatprep.subr.bf16.mxu0 0
      %2254 = vmatpush1.bf16.msra.mxu0 %v2178
      %2255 = vmatprep.subr.bf16.mxu0 0
      %2256 = vmatpush2.bf16.msra.mxu0 0
      %2257 = vmatprep.subr.bf16.mxu0 0
      %2258 = vmatpush2.bf16.msra.mxu0 0
      %2259 = vmatprep.subr.bf16.mxu0 0
      %2260 = vmatpush2.bf16.msra.mxu0 0
      %2261 = vmatprep.subr.bf16.mxu0 0
      %2262 = vmatpush2.bf16.msra.mxu0 0
      %2263 = vmatprep.subr.bf16.mxu0 0
      %2264 = vmatpush2.bf16.msra.mxu0 0
      %2265 = vmatprep.subr.bf16.mxu0 0
      %2266 = vmatpush2.bf16.msra.mxu0 0
      %2267 = vmatprep.subr.bf16.mxu0 0
      %2268 = vmatpush2.bf16.msra.mxu0 0
      %2269 = vmatprep.subr.bf16.mxu0 0
      %2270 = vmatpush2.bf16.msra.mxu0 0
      %2271 = vmatprep.mubr.bf16.mxu0 0
      %2272 = vmatmul.mubr.bf16.gmra.mxu0 %v2192
      %v2273 = vpop.f32.mrf.mxu0
      %v2274 = vadd.f32 %v2152, %v2273
      %v2275 = vpop.f32.mrf.mxu0
      %v2276 = vpop.f32.mrf.mxu0
      %v2277 = vadd.f32 %v2152, %v2276
      %v2278 = vpop.f32.mrf.mxu0
      %2279 = vmatprep.mubr.bf16.mxu0 0
      %2280 = vmatmul.mubr.bf16.gmra.mxu0 %v2195
      %v2281 = vpop.f32.mrf.mxu0
      %v2282 = vadd.f32 %v2152, %v2281
      %v2283 = vpop.f32.mrf.mxu0
      %v2284 = vpop.f32.mrf.mxu0
      %v2285 = vadd.f32 %v2152, %v2284
      %v2286 = vpop.f32.mrf.mxu0
      %2287 = vmatprep.mubr.bf16.mxu0 0
      %2288 = vmatmul.mubr.bf16.gmra.mxu0 %v2198
      %v2289 = vpop.f32.mrf.mxu0
      %v2290 = vadd.f32 %v2152, %v2289
      %v2291 = vpop.f32.mrf.mxu0
      %v2292 = vpop.f32.mrf.mxu0
      %v2293 = vadd.f32 %v2152, %v2292
      %v2294 = vpop.f32.mrf.mxu0
      %2295 = vmatprep.mubr.bf16.mxu0 0
      %2296 = vmatmul.mubr.bf16.gmra.mxu0 %v2201
      %v2297 = vpop.f32.mrf.mxu0
      %v2298 = vadd.f32 %v2152, %v2297
      %v2299 = vpop.f32.mrf.mxu0
      %v2300 = vpop.f32.mrf.mxu0
      %v2301 = vadd.f32 %v2152, %v2300
      %v2302 = vpop.f32.mrf.mxu0
      %2303 = vmatprep.mubr.bf16.mxu0 0
      %2304 = vmatmul.mubr.bf16.gmra.mxu0 %v2204
      %v2305 = vpop.f32.mrf.mxu0
      %v2306 = vadd.f32 %v2152, %v2305
      %v2307 = vpop.f32.mrf.mxu0
      %v2308 = vpop.f32.mrf.mxu0
      %v2309 = vadd.f32 %v2152, %v2308
      %v2310 = vpop.f32.mrf.mxu0
      %2311 = vmatprep.mubr.bf16.mxu0 0
      %2312 = vmatmul.mubr.bf16.gmra.mxu0 %v2207
      %v2313 = vpop.f32.mrf.mxu0
      %v2314 = vadd.f32 %v2152, %v2313
      %v2315 = vpop.f32.mrf.mxu0
      %v2316 = vpop.f32.mrf.mxu0
      %v2317 = vadd.f32 %v2152, %v2316
      %v2318 = vpop.f32.mrf.mxu0
      %2319 = vmatprep.mubr.bf16.mxu0 0
      %2320 = vmatmul.mubr.bf16.gmra.mxu0 %v2210
      %v2321 = vpop.f32.mrf.mxu0
      %v2322 = vadd.f32 %v2152, %v2321
      %v2323 = vpop.f32.mrf.mxu0
      %v2324 = vpop.f32.mrf.mxu0
      %v2325 = vadd.f32 %v2152, %v2324
      %v2326 = vpop.f32.mrf.mxu0
      %2327 = vmatprep.mubr.bf16.mxu0 0
      %2328 = vmatmul.mubr.bf16.gmra.mxu0 %v2213
      %v2329 = vpop.f32.mrf.mxu0
      %v2330 = vadd.f32 %v2152, %v2329
      %v2331 = vpop.f32.mrf.mxu0
      %v2332 = vpop.f32.mrf.mxu0
      %v2333 = vadd.f32 %v2152, %v2332
      %v2334 = vpop.f32.mrf.mxu0
      %2335 = vmatprep.mubr.bf16.mxu0 0
      %2336 = vmatmul.mubr.bf16.gmra.mxu0 %v2216
      %v2337 = vpop.f32.mrf.mxu0
      %v2338 = vadd.f32 %v2152, %v2337
      %v2339 = vpop.f32.mrf.mxu0
      %v2340 = vpop.f32.mrf.mxu0
      %v2341 = vadd.f32 %v2152, %v2340
      %v2342 = vpop.f32.mrf.mxu0
      %2343 = vmatprep.mubr.bf16.mxu0 0
      %2344 = vmatmul.mubr.bf16.gmra.mxu0 %v2219
      %v2345 = vpop.f32.mrf.mxu0
      %v2346 = vadd.f32 %v2152, %v2345
      %v2347 = vpop.f32.mrf.mxu0
      %v2348 = vpop.f32.mrf.mxu0
      %v2349 = vadd.f32 %v2152, %v2348
      %v2350 = vpop.f32.mrf.mxu0
      %2351 = vmatprep.mubr.bf16.mxu0 0
      %2352 = vmatmul.mubr.bf16.gmra.mxu0 %v2222
      %v2353 = vpop.f32.mrf.mxu0
      %v2354 = vadd.f32 %v2152, %v2353
      %v2355 = vpop.f32.mrf.mxu0
      %v2356 = vpop.f32.mrf.mxu0
      %v2357 = vadd.f32 %v2152, %v2356
      %v2358 = vpop.f32.mrf.mxu0
      %2359 = vmatprep.mubr.bf16.mxu0 0
      %2360 = vmatmul.mubr.bf16.gmra.mxu0 %v2225
      %v2361 = vpop.f32.mrf.mxu0
      %v2362 = vadd.f32 %v2152, %v2361
      %v2363 = vpop.f32.mrf.mxu0
      %v2364 = vpop.f32.mrf.mxu0
      %v2365 = vadd.f32 %v2152, %v2364
      %v2366 = vpop.f32.mrf.mxu0
      %2367 = vmatprep.mubr.bf16.mxu0 0
      %2368 = vmatmul.mubr.bf16.gmra.mxu0 %v2228
      %v2369 = vpop.f32.mrf.mxu0
      %v2370 = vadd.f32 %v2152, %v2369
      %v2371 = vpop.f32.mrf.mxu0
      %v2372 = vpop.f32.mrf.mxu0
      %v2373 = vadd.f32 %v2152, %v2372
      %v2374 = vpop.f32.mrf.mxu0
      %2375 = vmatprep.mubr.bf16.mxu0 0
      %2376 = vmatmul.mubr.bf16.gmra.mxu0 %v2231
      %v2377 = vpop.f32.mrf.mxu0
      %v2378 = vadd.f32 %v2152, %v2377
      %v2379 = vpop.f32.mrf.mxu0
      %v2380 = vpop.f32.mrf.mxu0
      %v2381 = vadd.f32 %v2152, %v2380
      %v2382 = vpop.f32.mrf.mxu0
      %2383 = vmatprep.mubr.bf16.mxu0 0
      %2384 = vmatmul.mubr.bf16.gmra.mxu0 %v2234
      %v2385 = vpop.f32.mrf.mxu0
      %v2386 = vadd.f32 %v2152, %v2385
      %v2387 = vpop.f32.mrf.mxu0
      %v2388 = vpop.f32.mrf.mxu0
      %v2389 = vadd.f32 %v2152, %v2388
      %v2390 = vpop.f32.mrf.mxu0
      %2391 = vmatprep.mubr.bf16.mxu0 0
      %2392 = vmatmul.mubr.bf16.gmra.mxu0 %v2237
      %v2393 = vpop.f32.mrf.mxu0
      %v2394 = vadd.f32 %v2152, %v2393
      %v2395 = vpop.f32.mrf.mxu0
      %v2396 = vpop.f32.mrf.mxu0
      %v2397 = vadd.f32 %v2152, %v2396
      %v2398 = vpop.f32.mrf.mxu0
      %2399 = vdwg.mxu0
      %2400 = vst.msk [vmem:[%s477] sm:$0xff] %vm1877, %v1790
      %2401 = vst.msk [vmem:[%s477 + $0x8] sm:$0xff] %vm1877, %v1791
      %2402 = vst.msk [vmem:[%s477 + $0x10] sm:$0xff] %vm1877, %v1792
      %2403 = vst.msk [vmem:[%s477 + $0x18] sm:$0xff] %vm1877, %v1793
      %2404 = vst.msk [vmem:[%s477 + $0x20] sm:$0xff] %vm1877, %v1794
      %2405 = vst.msk [vmem:[%s477 + $0x28] sm:$0xff] %vm1877, %v1795
      %2406 = vst.msk [vmem:[%s477 + $0x30] sm:$0xff] %vm1877, %v1796
      %2407 = vst.msk [vmem:[%s477 + $0x38] sm:$0xff] %vm1877, %v1797
      %2408 = vst.msk [vmem:[%s477 + $0x40] sm:$0xff] %vm1877, %v1798
      %2409 = vst.msk [vmem:[%s477 + $0x48] sm:$0xff] %vm1877, %v1799
      %2410 = vst.msk [vmem:[%s477 + $0x50] sm:$0xff] %vm1877, %v1800
      %2411 = vst.msk [vmem:[%s477 + $0x58] sm:$0xff] %vm1877, %v1801
      %2412 = vst.msk [vmem:[%s477 + $0x60] sm:$0xff] %vm1877, %v1802
      %2413 = vst.msk [vmem:[%s477 + $0x68] sm:$0xff] %vm1877, %v1803
      %2414 = vst.msk [vmem:[%s477 + $0x70] sm:$0xff] %vm1877, %v1804
      %2415 = vst.msk [vmem:[%s477 + $0x78] sm:$0xff] %vm1877, %v1805
      %2416 = vst.msk [vmem:[%s477 + $0x80] sm:$0xff] %vm1877, %v1806
      %2417 = vst.msk [vmem:[%s477 + $0x88] sm:$0xff] %vm1877, %v1807
      %2418 = vst.msk [vmem:[%s477 + $0x90] sm:$0xff] %vm1877, %v1808
      %2419 = vst.msk [vmem:[%s477 + $0x98] sm:$0xff] %vm1877, %v1809
      %2420 = vst.msk [vmem:[%s477 + $0xa0] sm:$0xff] %vm1877, %v1810
      %2421 = vst.msk [vmem:[%s477 + $0xa8] sm:$0xff] %vm1877, %v1811
      %2422 = vst.msk [vmem:[%s477 + $0xb0] sm:$0xff] %vm1877, %v1812
      %2423 = vst.msk [vmem:[%s477 + $0xb8] sm:$0xff] %vm1877, %v1813
      %2424 = vst.msk [vmem:[%s477 + $0xc0] sm:$0xff] %vm1877, %v1814
      %2425 = vst.msk [vmem:[%s477 + $0xc8] sm:$0xff] %vm1877, %v1815
      %2426 = vst.msk [vmem:[%s477 + $0xd0] sm:$0xff] %vm1877, %v1816
      %2427 = vst.msk [vmem:[%s477 + $0xd8] sm:$0xff] %vm1877, %v1817
      %2428 = vst.msk [vmem:[%s477 + $0xe0] sm:$0xff] %vm1877, %v1818
      %2429 = vst.msk [vmem:[%s477 + $0xe8] sm:$0xff] %vm1877, %v1819
      %2430 = vst.msk [vmem:[%s477 + $0xf0] sm:$0xff] %vm1877, %v1820
      %2431 = vst.msk [vmem:[%s477 + $0xf8] sm:$0xff] %vm1877, %v1821
      %vm2432 = vcmask 64512
      %2433 = vst.msk [vmem:[%s483] sm:$0xff] %vm2432, %v2274
      %2434 = vst.msk [vmem:[%s483 + $0x8] sm:$0xff] %vm2432, %v2277
      %2435 = vst.msk [vmem:[%s483 + $0x10] sm:$0xff] %vm2432, %v2282
      %2436 = vst.msk [vmem:[%s483 + $0x18] sm:$0xff] %vm2432, %v2285
      %2437 = vst.msk [vmem:[%s483 + $0x20] sm:$0xff] %vm2432, %v2290
      %2438 = vst.msk [vmem:[%s483 + $0x28] sm:$0xff] %vm2432, %v2293
      %2439 = vst.msk [vmem:[%s483 + $0x30] sm:$0xff] %vm2432, %v2298
      %2440 = vst.msk [vmem:[%s483 + $0x38] sm:$0xff] %vm2432, %v2301
      %2441 = vst.msk [vmem:[%s483 + $0x40] sm:$0xff] %vm2432, %v2306
      %2442 = vst.msk [vmem:[%s483 + $0x48] sm:$0xff] %vm2432, %v2309
      %2443 = vst.msk [vmem:[%s483 + $0x50] sm:$0xff] %vm2432, %v2314
      %2444 = vst.msk [vmem:[%s483 + $0x58] sm:$0xff] %vm2432, %v2317
      %2445 = vst.msk [vmem:[%s483 + $0x60] sm:$0xff] %vm2432, %v2322
      %2446 = vst.msk [vmem:[%s483 + $0x68] sm:$0xff] %vm2432, %v2325
      %2447 = vst.msk [vmem:[%s483 + $0x70] sm:$0xff] %vm2432, %v2330
      %2448 = vst.msk [vmem:[%s483 + $0x78] sm:$0xff] %vm2432, %v2333
      %2449 = vst.msk [vmem:[%s483 + $0x80] sm:$0xff] %vm2432, %v2338
      %2450 = vst.msk [vmem:[%s483 + $0x88] sm:$0xff] %vm2432, %v2341
      %2451 = vst.msk [vmem:[%s483 + $0x90] sm:$0xff] %vm2432, %v2346
      %2452 = vst.msk [vmem:[%s483 + $0x98] sm:$0xff] %vm2432, %v2349
      %2453 = vst.msk [vmem:[%s483 + $0xa0] sm:$0xff] %vm2432, %v2354
      %2454 = vst.msk [vmem:[%s483 + $0xa8] sm:$0xff] %vm2432, %v2357
      %2455 = vst.msk [vmem:[%s483 + $0xb0] sm:$0xff] %vm2432, %v2362
      %2456 = vst.msk [vmem:[%s483 + $0xb8] sm:$0xff] %vm2432, %v2365
      %2457 = vst.msk [vmem:[%s483 + $0xc0] sm:$0xff] %vm2432, %v2370
      %2458 = vst.msk [vmem:[%s483 + $0xc8] sm:$0xff] %vm2432, %v2373
      %2459 = vst.msk [vmem:[%s483 + $0xd0] sm:$0xff] %vm2432, %v2378
      %2460 = vst.msk [vmem:[%s483 + $0xd8] sm:$0xff] %vm2432, %v2381
      %2461 = vst.msk [vmem:[%s483 + $0xe0] sm:$0xff] %vm2432, %v2386
      %2462 = vst.msk [vmem:[%s483 + $0xe8] sm:$0xff] %vm2432, %v2389
      %2463 = vst.msk [vmem:[%s483 + $0xf0] sm:$0xff] %vm2432, %v2394
      %2464 = vst.msk [vmem:[%s483 + $0xf8] sm:$0xff] %vm2432, %v2397
      %s2465 = smul.u32 32, %s26
      %p2466 = scmp.lt.s32.totalorder %s2465, 63
      %s2467 = scalar_select %p2466, %s2465, 63
      %s2468 = smul.addr %s2467, 8
      %s2469 = scalar_lea.vmem %s13, %s2468
      %s2470 = smul.u32 32, %s26
      %p2471 = scmp.lt.s32.totalorder %s2470, 63
      %s2472 = scalar_select %p2471, %s2470, 63
      %s2473 = smul.addr %s2472, 8
      %s2474 = scalar_lea.vmem %s14, %s2473
      // Predicated region
      $region73: #{mhd_pinns_forward.1} parent=71 // pred_check
        %p2475 = pneg %p322
      $region74: #{mhd_pinns_forward.1} parent=71 // pred_check_branch
        %2477 = sbr.rel (%p2475) target = $region76
      $region75: #{mhd_pinns_forward.1} parent=71 // pred_region
        %s2478 = smul.u32 32, %s26
      $region76: #{mhd_pinns_forward.1} parent=71 // pred_fallthru
        _
      // Predicated region
      $region77: #{mhd_pinns_forward.1} parent=71 // pred_check
        %p2479 = pneg %p348
      $region78: #{mhd_pinns_forward.1} parent=71 // pred_check_branch
        %2481 = sbr.rel (%p2479) target = $region80
      $region79: #{mhd_pinns_forward.1} parent=71 // pred_region
        %s2482 = smul.u32 32, %s26
      $region80: #{mhd_pinns_forward.1} parent=71 // pred_fallthru
        _
    $region72: #{mhd_pinns_forward.1} parent=5 // pred_fallthru
      _
    %p2483 = scmp.le.s32.totalorder 2, %s21
    // Predicated region
    $region81: #{mhd_pinns_forward.1} parent=5 // pred_check
      %p2484 = pneg %p2483
    $region82: #{mhd_pinns_forward.1} parent=5 // pred_check_branch
      %2486 = sbr.rel (%p2484) target = $region84
    $region83: #{mhd_pinns_forward.1} parent=5 // pred_region
      %s2487 = ssub.s32 %s21, 2
      // Predicated region
      $region85: #{mhd_pinns_forward.1} parent=83 // pred_check
        %p2488 = pneg %p328
      $region86: #{mhd_pinns_forward.1} parent=83 // pred_check_branch
        %2490 = sbr.rel (%p2488) target = $region88
      $region87: #{mhd_pinns_forward.1} parent=83 // pred_region
        %s2491 = smul.u32 32, %s27
        %p2492 = scmp.lt.s32.totalorder %s2491, 63
        %s2493 = scalar_select %p2492, %s2491, 63
        %s2494 = smul.addr %s2493, 8
        %s2495 = scalar_lea.vmem %s13, %s2494
      $region88: #{mhd_pinns_forward.1} parent=83 // pred_fallthru
        _
      // Predicated region
      $region89: #{mhd_pinns_forward.1} parent=83 // pred_check
        %p2496 = pneg %p354
      $region90: #{mhd_pinns_forward.1} parent=83 // pred_check_branch
        %2498 = sbr.rel (%p2496) target = $region92
      $region91: #{mhd_pinns_forward.1} parent=83 // pred_region
        %s2499 = smul.u32 32, %s27
        %p2500 = scmp.lt.s32.totalorder %s2499, 63
        %s2501 = scalar_select %p2500, %s2499, 63
        %s2502 = smul.addr %s2501, 8
        %s2503 = scalar_lea.vmem %s14, %s2502
      $region92: #{mhd_pinns_forward.1} parent=83 // pred_fallthru
        _
    $region84: #{mhd_pinns_forward.1} parent=5 // pred_fallthru
      _
  $region6: #{mhd_pinns_forward.1} parent=0 // loop_footer
    %s25 = sadd.s32 1, %s21
  $region7: #{mhd_pinns_forward.1} parent=0 // loop_footer_branch
    %20 = sbr.rel target = $region3
  $region8: #{mhd_pinns_forward.1} parent=0 // loop_exit
    _

</llo_original>
